<compile_context>
chip_gen: v5e
topology: v5e:2x2
jax: 0.10.0
libtpu: 0.0.40
codegen_flags: <defaults>
</compile_context>

<pallas_src>
import math

import jax
import jax.numpy as jnp
from jax import lax
from jax.experimental import pallas as pl
from jax.experimental.pallas import tpu as pltpu


# ----------------------------- helpers ---------------------------------------

def _layernorm(x, gamma, beta, eps=1e-5):
    mean = jnp.mean(x, axis=-1, keepdims=True)
    var = jnp.mean((x - mean) ** 2, axis=-1, keepdims=True)
    return (x - mean) * lax.rsqrt(var + eps) * gamma + beta


# ------------------------------ kernel ----------------------------------------

def _make_kernel(meta, *, num_heads, num_layers, embed_dim, batch, seq):
    mat_offs = meta["mat_offs"]       # static python ints
    mat_shapes = meta["mat_shapes"]
    vec_widths = meta["vec_widths"]

    E = embed_dim
    H = num_heads
    hd = E // H
    Bb = batch                        # sequences handled by this grid step
    S = seq
    R = Bb * S
    scale = 1.0 / math.sqrt(hd)

    def kernel(x_ref, w_ref, v_ref, o_ref):
        # Static slices into the packed slabs (free: just ref views/loads).
        def mat(i):
            r0 = mat_offs[i]
            rr, cc = mat_shapes[i]
            return w_ref[r0:r0 + rr, :cc]

        def vec(i):
            return v_ref[i:i + 1, :vec_widths[i]]          # (1, width)

        x = x_ref[...]                                     # (R, IN)

        # input projection + pre-encoder LayerNorm
        h = jnp.dot(x, mat(0), preferred_element_type=jnp.float32) + vec(0)
        h = _layernorm(h, vec(1), vec(2))

        # additive causal mask (torch.triu diag=1), hoisted & pre-broadcast once
        ri = lax.broadcasted_iota(jnp.int32, (S, S), 0)
        ci = lax.broadcasted_iota(jnp.int32, (S, S), 1)
        neg = jnp.where(ci > ri, jnp.float32(-1e30), jnp.float32(0.0))
        neg_b = jnp.broadcast_to(neg[None, :, :], (Bb, S, S))

        for l in range(num_layers):
            mb = 1 + 4 * l
            vb = 3 + 8 * l
            Wqkv, Wo, W1, W2 = mat(mb), mat(mb + 1), mat(mb + 2), mat(mb + 3)
            bqkv, bo = vec(vb), vec(vb + 1)
            ln1g, ln1b = vec(vb + 2), vec(vb + 3)
            ln2g, ln2b = vec(vb + 4), vec(vb + 5)
            b1, b2 = vec(vb + 6), vec(vb + 7)

            # one big QKV projection over all B*S rows, reshaped once per layer
            qkv = jnp.dot(h, Wqkv, preferred_element_type=jnp.float32) + bqkv
            qkv3 = qkv.reshape(Bb, S, 3 * E)               # leading split: cheap

            # per-head attention, accumulated through Wo row-blocks (no concat)
            attn = bo                                      # (1, E) -> broadcasts
            for hh in range(H):
                lo = hh * hd
                qh = qkv3[:, :, lo:lo + hd]                # (Bb, S, hd)
                kh = qkv3[:, :, E + lo:E + lo + hd]
                vh = qkv3[:, :, 2 * E + lo:2 * E + lo + hd]

                s = jnp.einsum('bqd,bkd->bqk', qh, kh,
                               preferred_element_type=jnp.float32) * scale
                s = s + neg_b
                s = s - jnp.max(s, axis=-1, keepdims=True)
                p = jnp.exp(s)
                p = p * pl.reciprocal(jnp.sum(p, axis=-1, keepdims=True),
                                      approx=True)
                ctx = jnp.einsum('bqk,bkd->bqd', p, vh,
                                 preferred_element_type=jnp.float32)
                attn = attn + jnp.dot(ctx.reshape(R, hd), Wo[lo:lo + hd, :],
                                      preferred_element_type=jnp.float32)

            h = _layernorm(h + attn, ln1g, ln1b)           # post-norm (norm1)
            ff = jnp.maximum(
                jnp.dot(h, W1, preferred_element_type=jnp.float32) + b1, 0.0)
            ff = jnp.dot(ff, W2, preferred_element_type=jnp.float32) + b2
            h = _layernorm(h + ff, ln2g, ln2b)             # post-norm (norm2)

        out = jnp.dot(h, mat(1 + 4 * num_layers),
                      preferred_element_type=jnp.float32) + vec(3 + 8 * num_layers)
        o_ref[...] = jax.nn.sigmoid(out)                   # (R, O) lane-dense slab

    return kernel


# --------------------------- params & packing ---------------------------------

def init_params(key, input_dim, embed_dim, num_heads, dim_ff, output_dim,
                num_layers=2, scale=0.05):
    """Structured synthetic weights, kernel layout: W stored (in, out), b (out,)."""
    def dense(k, fi, fo):
        kw, kb = jax.random.split(k)
        return (jax.random.normal(kw, (fi, fo), jnp.float32) * scale,
                jax.random.normal(kb, (fo,), jnp.float32) * scale)

    keys = jax.random.split(key, 2 + 3 * num_layers)
    mats, vecs = [], []

    W, b = dense(keys[0], input_dim, embed_dim)            # input_proj
    mats.append(W)
    vecs += [b, jnp.ones((embed_dim,), jnp.float32),       # pre-encoder LN
             jnp.zeros((embed_dim,), jnp.float32)]

    for l in range(num_layers):
        k_attn, k_out, k_ff = keys[2 + 3 * l: 5 + 3 * l]
        Wqkv, bqkv = dense(k_attn, embed_dim, 3 * embed_dim)   # in_proj (QKV)
        Wo, bo = dense(k_out, embed_dim, embed_dim)            # out_proj
        k1, k2 = jax.random.split(k_ff)
        W1, b1 = dense(k1, embed_dim, dim_ff)                  # linear1
        W2, b2 = dense(k2, dim_ff, embed_dim)                  # linear2
        mats += [Wqkv, Wo, W1, W2]
        vecs += [bqkv, bo,
                 jnp.ones((embed_dim,), jnp.float32),          # norm1
                 jnp.zeros((embed_dim,), jnp.float32),
                 jnp.ones((embed_dim,), jnp.float32),          # norm2
                 jnp.zeros((embed_dim,), jnp.float32),
                 b1, b2]

    Wf, bf = dense(keys[1], embed_dim, output_dim)             # fc_out
    mats.append(Wf)
    vecs.append(bf)
    return mats, vecs


def pack_params(mats, vecs):
    """Pack all matrices into one row-stacked slab and all vectors into another."""
    maxc = max([m.shape[1] for m in mats] + [v.shape[-1] for v in vecs])
    mat_offs, mat_shapes, rows = [], [], []
    r = 0
    for m in mats:
        mat_offs.append(r)
        mat_shapes.append((int(m.shape[0]), int(m.shape[1])))
        rows.append(jnp.pad(m, ((0, 0), (0, maxc - m.shape[1]))))
        r += m.shape[0]
    wslab = jnp.concatenate(rows, axis=0)
    vslab = jnp.stack([jnp.pad(v, (0, maxc - v.shape[-1])) for v in vecs], axis=0)
    meta = dict(mat_offs=mat_offs, mat_shapes=mat_shapes,
                vec_widths=[int(v.shape[-1]) for v in vecs])
    return wslab, vslab, meta


# ------------------------------ wrapper ----------------------------------------

def blitz_forward(x, wslab, vslab, meta, *, num_heads, num_layers, embed_dim,
                  output_dim, batch_blocks=1):
    B, S, IN = x.shape
    assert B % batch_blocks == 0
    Bb = B // batch_blocks
    R, Rblk = B * S, Bb * S
    x_flat = x.reshape(R, IN)

    kernel = _make_kernel(meta, num_heads=num_heads, num_layers=num_layers,
                          embed_dim=embed_dim, batch=Bb, seq=S)

    out_flat = pl.pallas_call(
        kernel,
        out_shape=jax.ShapeDtypeStruct((R, output_dim), jnp.float32),
        grid=(batch_blocks,),      # 1 => single invocation; 2 => v7x core split
        in_specs=[
            pl.BlockSpec((Rblk, IN), lambda i: (i, 0)),
            pl.BlockSpec(wslab.shape, lambda i: (0, 0)),   # constant weight slab
            pl.BlockSpec(vslab.shape, lambda i: (0, 0)),   # constant bias/LN slab
        ],
        out_specs=pl.BlockSpec((Rblk, output_dim), lambda i: (i, 0)),
        compiler_params=pltpu.CompilerParams(
            dimension_semantics=("parallel",)),
    )(x_flat, wslab, vslab)
    return out_flat.reshape(B, S, output_dim)


# ------------------------------ reference --------------------------------------

def _ref_single(x, mats, vecs, num_heads, num_layers):
    E = mats[0].shape[1]
    hd = E // num_heads
    scale = 1.0 / math.sqrt(hd)
    h = x @ mats[0] + vecs[0]
    h = _layernorm(h, vecs[1], vecs[2])
    S = x.shape[0]
    causal = jnp.triu(jnp.ones((S, S), bool), k=1)
    for l in range(num_layers):
        Wqkv, Wo, W1, W2 = mats[1 + 4 * l: 5 + 4 * l]
        bqkv, bo, ln1g, ln1b, ln2g, ln2b, b1, b2 = vecs[3 + 8 * l: 11 + 8 * l]
        qkv = h @ Wqkv + bqkv
        q, k, v = qkv[:, :E], qkv[:, E:2 * E], qkv[:, 2 * E:]
        heads = []
        for hh in range(num_heads):
            sl = slice(hh * hd, (hh + 1) * hd)
            s = (q[:, sl] @ k[:, sl].T) * scale
            s = jnp.where(causal, -1e30, s)
            p = jax.nn.softmax(s, axis=-1)
            heads.append(p @ v[:, sl])
        attn = jnp.concatenate(heads, axis=1) @ Wo + bo
        h = _layernorm(h + attn, ln1g, ln1b)
        ff = jnp.maximum(h @ W1 + b1, 0.0) @ W2 + b2
        h = _layernorm(h + ff, ln2g, ln2b)
    return jax.nn.sigmoid(h @ mats[-1] + vecs[-1])


# -------------------------------- main ------------------------------------------

if __name__ == "__main__":
    # Model hyper-parameters (small, consistent with the module signature).
    INPUT_DIM, EMBED_DIM, MAX_SEQ_LEN = 16, 32, 16   # MAX_SEQ_LEN only feeds the
    NUM_HEADS, DIM_FF, OUTPUT_DIM = 4, 64, 8         # unused time_embedding.
    NUM_LAYERS = 2
    B, S = 2, 8

    key = jax.random.PRNGKey(0)
    kx, kp = jax.random.split(key)
    x = jax.random.normal(kx, (B, S, INPUT_DIM), jnp.float32)
    mats, vecs = init_params(kp, INPUT_DIM, EMBED_DIM, NUM_HEADS, DIM_FF,
                             OUTPUT_DIM, NUM_LAYERS)
    wslab, vslab, meta = pack_params(mats, vecs)

    out = blitz_forward(x, wslab, vslab, meta, num_heads=NUM_HEADS,
                        num_layers=NUM_LAYERS, embed_dim=EMBED_DIM,
                        output_dim=OUTPUT_DIM, batch_blocks=1)
    out = jax.block_until_ready(out)

    ref = jax.vmap(lambda xb: _ref_single(xb, mats, vecs, NUM_HEADS, NUM_LAYERS))(x)
    ref = jax.block_until_ready(ref)

    assert out.shape == (B, S, OUTPUT_DIM)
    err = float(jnp.max(jnp.abs(out - ref)))
    # 1e-3 abs tolerance on sigmoid probabilities: the approximate EUP
    # reciprocal in the softmax denominator introduces a small (~1e-4-level)
    # relative error relative to the exact-division reference.
    assert err < 1e-3, f"max err {err}"
    print("KERNEL_OK")
</pallas_src>

<mosaic_0001>
module attributes {stable_mosaic.version = 11 : i64} {
  func.func @kernel(%arg0: i32, %arg1: memref<16x16xf32, #tpu.memory_space<vmem>>, %arg2: memref<368x96xf32, #tpu.memory_space<vmem>>, %arg3: memref<20x96xf32, #tpu.memory_space<vmem>>, %arg4: memref<16x8xf32, #tpu.memory_space<vmem>>) attributes {dimension_semantics = [#tpu.dimension_semantics<parallel>], iteration_bounds = array<i64: 1>, scalar_prefetch = 0 : i64, scratch_operands = 0 : i64, tpu.core_type = #tpu.core_type<tc>, window_params = [{transform_indices = @transform_0, window_bounds = array<i64: 16, 16>}, {pipeline_mode = #tpu.pipeline_mode<synchronous>, transform_indices = @transform_1, window_bounds = array<i64: 368, 96>}, {pipeline_mode = #tpu.pipeline_mode<synchronous>, transform_indices = @transform_2, window_bounds = array<i64: 20, 96>}, {transform_indices = @transform_3, window_bounds = array<i64: 16, 8>}]} {
    %c0 = arith.constant 0 : index
    %c0_0 = arith.constant 0 : index
    %0 = vector.load %arg1[%c0, %c0_0] : memref<16x16xf32, #tpu.memory_space<vmem>>, vector<16x16xf32>
    %c0_1 = arith.constant 0 : index
    %c0_2 = arith.constant 0 : index
    %1 = vector.load %arg2[%c0_1, %c0_2] : memref<368x96xf32, #tpu.memory_space<vmem>>, vector<16x32xf32>
    %cst = arith.constant dense<0.000000e+00> : vector<16x32xf32>
    %2 = tpu.matmul %0, %1, %cst {dimension_numbers = #tpu.dot_dimension_numbers<[1], [0], [0], [1], [0, 0, 1, 1], [], []>} : vector<16x16xf32>, vector<16x32xf32>, vector<16x32xf32> -> vector<16x32xf32>
    %c0_3 = arith.constant 0 : index
    %c0_4 = arith.constant 0 : index
    %3 = vector.load %arg3[%c0_3, %c0_4] : memref<20x96xf32, #tpu.memory_space<vmem>>, vector<1x32xf32>
    %4 = vector.broadcast %3 : vector<1x32xf32> to vector<16x32xf32>
    %5 = arith.addf %2, %4 : vector<16x32xf32>
    %c1 = arith.constant 1 : index
    %c0_5 = arith.constant 0 : index
    %6 = vector.load %arg3[%c1, %c0_5] : memref<20x96xf32, #tpu.memory_space<vmem>>, vector<1x32xf32>
    %c2 = arith.constant 2 : index
    %c0_6 = arith.constant 0 : index
    %7 = vector.load %arg3[%c2, %c0_6] : memref<20x96xf32, #tpu.memory_space<vmem>>, vector<1x32xf32>
    %cst_7 = arith.constant dense<0.000000e+00> : vector<16xf32>
    %8 = vector.multi_reduction <add>, %5, %cst_7 [1] : vector<16x32xf32> to vector<16xf32>
    %9 = vector.shape_cast %8 : vector<16xf32> to vector<16x1xf32>
    %cst_8 = arith.constant 3.200000e+01 : f32
    %10 = vector.broadcast %cst_8 : f32 to vector<16x1xf32>
    %11 = arith.divf %9, %10 : vector<16x1xf32>
    %12 = vector.broadcast %11 : vector<16x1xf32> to vector<16x32xf32>
    %13 = arith.subf %5, %12 : vector<16x32xf32>
    %14 = arith.mulf %13, %13 : vector<16x32xf32>
    %cst_9 = arith.constant dense<0.000000e+00> : vector<16xf32>
    %15 = vector.multi_reduction <add>, %14, %cst_9 [1] : vector<16x32xf32> to vector<16xf32>
    %16 = vector.shape_cast %15 : vector<16xf32> to vector<16x1xf32>
    %cst_10 = arith.constant 3.200000e+01 : f32
    %17 = vector.broadcast %cst_10 : f32 to vector<16x1xf32>
    %18 = arith.divf %16, %17 : vector<16x1xf32>
    %19 = vector.broadcast %11 : vector<16x1xf32> to vector<16x32xf32>
    %20 = arith.subf %5, %19 : vector<16x32xf32>
    %cst_11 = arith.constant 9.99999974E-6 : f32
    %21 = vector.broadcast %cst_11 : f32 to vector<16x1xf32>
    %22 = arith.addf %18, %21 : vector<16x1xf32>
    %23 = math.rsqrt %22 : vector<16x1xf32>
    %24 = vector.broadcast %23 : vector<16x1xf32> to vector<16x32xf32>
    %25 = arith.mulf %20, %24 : vector<16x32xf32>
    %26 = vector.broadcast %6 : vector<1x32xf32> to vector<16x32xf32>
    %27 = arith.mulf %25, %26 : vector<16x32xf32>
    %28 = vector.broadcast %7 : vector<1x32xf32> to vector<16x32xf32>
    %29 = arith.addf %27, %28 : vector<16x32xf32>
    %30 = tpu.iota {dimensions = array<i32: 0>} : vector<8x8xi32>
    %31 = tpu.iota {dimensions = array<i32: 1>} : vector<8x8xi32>
    %32 = arith.cmpi sgt, %31, %30 : vector<8x8xi32>
    %cst_12 = arith.constant -1.000000e+30 : f32
    %cst_13 = arith.constant 0.000000e+00 : f32
    %33 = vector.broadcast %cst_12 : f32 to vector<8x8xf32>
    %34 = vector.broadcast %cst_13 : f32 to vector<8x8xf32>
    %35 = arith.select %32, %33, %34 : vector<8x8xi1>, vector<8x8xf32>
    %36 = vector.shape_cast %35 : vector<8x8xf32> to vector<1x8x8xf32>
    %37 = vector.shape_cast %36 : vector<1x8x8xf32> to vector<1x8x8xf32>
    %38 = vector.broadcast %37 : vector<1x8x8xf32> to vector<2x8x8xf32>
    %c16 = arith.constant 16 : index
    %c0_14 = arith.constant 0 : index
    %39 = vector.load %arg2[%c16, %c0_14] : memref<368x96xf32, #tpu.memory_space<vmem>>, vector<32x96xf32>
    %c48 = arith.constant 48 : index
    %c0_15 = arith.constant 0 : index
    %40 = vector.load %arg2[%c48, %c0_15] : memref<368x96xf32, #tpu.memory_space<vmem>>, vector<32x32xf32>
    %c80 = arith.constant 80 : index
    %c0_16 = arith.constant 0 : index
    %41 = vector.load %arg2[%c80, %c0_16] : memref<368x96xf32, #tpu.memory_space<vmem>>, vector<32x64xf32>
    %c112 = arith.constant 112 : index
    %c0_17 = arith.constant 0 : index
    %42 = vector.load %arg2[%c112, %c0_17] : memref<368x96xf32, #tpu.memory_space<vmem>>, vector<64x32xf32>
    %c3 = arith.constant 3 : index
    %c0_18 = arith.constant 0 : index
    %43 = vector.load %arg3[%c3, %c0_18] : memref<20x96xf32, #tpu.memory_space<vmem>>, vector<1x96xf32>
    %c4 = arith.constant 4 : index
    %c0_19 = arith.constant 0 : index
    %44 = vector.load %arg3[%c4, %c0_19] : memref<20x96xf32, #tpu.memory_space<vmem>>, vector<1x32xf32>
    %c5 = arith.constant 5 : index
    %c0_20 = arith.constant 0 : index
    %45 = vector.load %arg3[%c5, %c0_20] : memref<20x96xf32, #tpu.memory_space<vmem>>, vector<1x32xf32>
    %c6 = arith.constant 6 : index
    %c0_21 = arith.constant 0 : index
    %46 = vector.load %arg3[%c6, %c0_21] : memref<20x96xf32, #tpu.memory_space<vmem>>, vector<1x32xf32>
    %c7 = arith.constant 7 : index
    %c0_22 = arith.constant 0 : index
    %47 = vector.load %arg3[%c7, %c0_22] : memref<20x96xf32, #tpu.memory_space<vmem>>, vector<1x32xf32>
    %c8 = arith.constant 8 : index
    %c0_23 = arith.constant 0 : index
    %48 = vector.load %arg3[%c8, %c0_23] : memref<20x96xf32, #tpu.memory_space<vmem>>, vector<1x32xf32>
    %c9 = arith.constant 9 : index
    %c0_24 = arith.constant 0 : index
    %49 = vector.load %arg3[%c9, %c0_24] : memref<20x96xf32, #tpu.memory_space<vmem>>, vector<1x64xf32>
    %c10 = arith.constant 10 : index
    %c0_25 = arith.constant 0 : index
    %50 = vector.load %arg3[%c10, %c0_25] : memref<20x96xf32, #tpu.memory_space<vmem>>, vector<1x32xf32>
    %cst_26 = arith.constant dense<0.000000e+00> : vector<16x96xf32>
    %51 = tpu.matmul %29, %39, %cst_26 {dimension_numbers = #tpu.dot_dimension_numbers<[1], [0], [0], [1], [0, 0, 1, 1], [], []>} : vector<16x32xf32>, vector<32x96xf32>, vector<16x96xf32> -> vector<16x96xf32>
    %52 = vector.broadcast %43 : vector<1x96xf32> to vector<16x96xf32>
    %53 = arith.addf %51, %52 : vector<16x96xf32>
    %54 = vector.shape_cast %53 : vector<16x96xf32> to vector<2x8x96xf32>
    %55 = vector.extract_strided_slice %54 {offsets = [0, 0, 0], sizes = [2, 8, 8], strides = [1, 1, 1]} : vector<2x8x96xf32> to vector<2x8x8xf32>
    %56 = vector.extract_strided_slice %54 {offsets = [0, 0, 32], sizes = [2, 8, 8], strides = [1, 1, 1]} : vector<2x8x96xf32> to vector<2x8x8xf32>
    %57 = vector.extract_strided_slice %54 {offsets = [0, 0, 64], sizes = [2, 8, 8], strides = [1, 1, 1]} : vector<2x8x96xf32> to vector<2x8x8xf32>
    "tpu.trace_start"() <{level = 10 : i32, message = "bqd,bkd->bqk"}> : () -> ()
    %cst_27 = arith.constant dense<0.000000e+00> : vector<2x8x8xf32>
    %58 = tpu.matmul %55, %56, %cst_27 {dimension_numbers = #tpu.dot_dimension_numbers<[2], [2], [1], [1], [0, 0, 0, 1, 1, 1], [0], [0]>} : vector<2x8x8xf32>, vector<2x8x8xf32>, vector<2x8x8xf32> -> vector<2x8x8xf32>
    "tpu.trace_stop"() : () -> ()
    %cst_28 = arith.constant 0.353553385 : f32
    %59 = vector.broadcast %cst_28 : f32 to vector<2x8x8xf32>
    %60 = arith.mulf %58, %59 : vector<2x8x8xf32>
    %61 = arith.addf %60, %38 : vector<2x8x8xf32>
    %cst_29 = arith.constant dense<0xFF800000> : vector<2x8xf32>
    %62 = vector.multi_reduction <maximumf>, %61, %cst_29 [2] : vector<2x8x8xf32> to vector<2x8xf32>
    %63 = vector.shape_cast %62 : vector<2x8xf32> to vector<2x8x1xf32>
    %64 = vector.broadcast %63 : vector<2x8x1xf32> to vector<2x8x8xf32>
    %65 = arith.subf %61, %64 : vector<2x8x8xf32>
    %66 = math.exp %65 : vector<2x8x8xf32>
    %cst_30 = arith.constant dense<0.000000e+00> : vector<2x8xf32>
    %67 = vector.multi_reduction <add>, %66, %cst_30 [2] : vector<2x8x8xf32> to vector<2x8xf32>
    %68 = vector.shape_cast %67 : vector<2x8xf32> to vector<2x8x1xf32>
    %69 = tpu.reciprocal %68 {approx = true} : vector<2x8x1xf32> -> vector<2x8x1xf32>
    %70 = vector.broadcast %69 : vector<2x8x1xf32> to vector<2x8x8xf32>
    %71 = arith.mulf %66, %70 : vector<2x8x8xf32>
    "tpu.trace_start"() <{level = 10 : i32, message = "bqk,bkd->bqd"}> : () -> ()
    %cst_31 = arith.constant dense<0.000000e+00> : vector<2x8x8xf32>
    %72 = tpu.matmul %71, %57, %cst_31 {dimension_numbers = #tpu.dot_dimension_numbers<[2], [1], [1], [2], [0, 0, 0, 1, 1, 2], [0], [0]>} : vector<2x8x8xf32>, vector<2x8x8xf32>, vector<2x8x8xf32> -> vector<2x8x8xf32>
    "tpu.trace_stop"() : () -> ()
    %73 = vector.shape_cast %72 : vector<2x8x8xf32> to vector<16x8xf32>
    %74 = vector.extract_strided_slice %40 {offsets = [0, 0], sizes = [8, 32], strides = [1, 1]} : vector<32x32xf32> to vector<8x32xf32>
    %cst_32 = arith.constant dense<0.000000e+00> : vector<16x32xf32>
    %75 = tpu.matmul %73, %74, %cst_32 {dimension_numbers = #tpu.dot_dimension_numbers<[1], [0], [0], [1], [0, 0, 1, 1], [], []>} : vector<16x8xf32>, vector<8x32xf32>, vector<16x32xf32> -> vector<16x32xf32>
    %76 = vector.broadcast %44 : vector<1x32xf32> to vector<16x32xf32>
    %77 = arith.addf %76, %75 : vector<16x32xf32>
    %78 = vector.extract_strided_slice %54 {offsets = [0, 0, 8], sizes = [2, 8, 8], strides = [1, 1, 1]} : vector<2x8x96xf32> to vector<2x8x8xf32>
    %79 = vector.extract_strided_slice %54 {offsets = [0, 0, 40], sizes = [2, 8, 8], strides = [1, 1, 1]} : vector<2x8x96xf32> to vector<2x8x8xf32>
    %80 = vector.extract_strided_slice %54 {offsets = [0, 0, 72], sizes = [2, 8, 8], strides = [1, 1, 1]} : vector<2x8x96xf32> to vector<2x8x8xf32>
    "tpu.trace_start"() <{level = 10 : i32, message = "bqd,bkd->bqk"}> : () -> ()
    %cst_33 = arith.constant dense<0.000000e+00> : vector<2x8x8xf32>
    %81 = tpu.matmul %78, %79, %cst_33 {dimension_numbers = #tpu.dot_dimension_numbers<[2], [2], [1], [1], [0, 0, 0, 1, 1, 1], [0], [0]>} : vector<2x8x8xf32>, vector<2x8x8xf32>, vector<2x8x8xf32> -> vector<2x8x8xf32>
    "tpu.trace_stop"() : () -> ()
    %cst_34 = arith.constant 0.353553385 : f32
    %82 = vector.broadcast %cst_34 : f32 to vector<2x8x8xf32>
    %83 = arith.mulf %81, %82 : vector<2x8x8xf32>
    %84 = arith.addf %83, %38 : vector<2x8x8xf32>
    %cst_35 = arith.constant dense<0xFF800000> : vector<2x8xf32>
    %85 = vector.multi_reduction <maximumf>, %84, %cst_35 [2] : vector<2x8x8xf32> to vector<2x8xf32>
    %86 = vector.shape_cast %85 : vector<2x8xf32> to vector<2x8x1xf32>
    %87 = vector.broadcast %86 : vector<2x8x1xf32> to vector<2x8x8xf32>
    %88 = arith.subf %84, %87 : vector<2x8x8xf32>
    %89 = math.exp %88 : vector<2x8x8xf32>
    %cst_36 = arith.constant dense<0.000000e+00> : vector<2x8xf32>
    %90 = vector.multi_reduction <add>, %89, %cst_36 [2] : vector<2x8x8xf32> to vector<2x8xf32>
    %91 = vector.shape_cast %90 : vector<2x8xf32> to vector<2x8x1xf32>
    %92 = tpu.reciprocal %91 {approx = true} : vector<2x8x1xf32> -> vector<2x8x1xf32>
    %93 = vector.broadcast %92 : vector<2x8x1xf32> to vector<2x8x8xf32>
    %94 = arith.mulf %89, %93 : vector<2x8x8xf32>
    "tpu.trace_start"() <{level = 10 : i32, message = "bqk,bkd->bqd"}> : () -> ()
    %cst_37 = arith.constant dense<0.000000e+00> : vector<2x8x8xf32>
    %95 = tpu.matmul %94, %80, %cst_37 {dimension_numbers = #tpu.dot_dimension_numbers<[2], [1], [1], [2], [0, 0, 0, 1, 1, 2], [0], [0]>} : vector<2x8x8xf32>, vector<2x8x8xf32>, vector<2x8x8xf32> -> vector<2x8x8xf32>
    "tpu.trace_stop"() : () -> ()
    %96 = vector.shape_cast %95 : vector<2x8x8xf32> to vector<16x8xf32>
    %97 = vector.extract_strided_slice %40 {offsets = [8, 0], sizes = [8, 32], strides = [1, 1]} : vector<32x32xf32> to vector<8x32xf32>
    %cst_38 = arith.constant dense<0.000000e+00> : vector<16x32xf32>
    %98 = tpu.matmul %96, %97, %cst_38 {dimension_numbers = #tpu.dot_dimension_numbers<[1], [0], [0], [1], [0, 0, 1, 1], [], []>} : vector<16x8xf32>, vector<8x32xf32>, vector<16x32xf32> -> vector<16x32xf32>
    %99 = arith.addf %77, %98 : vector<16x32xf32>
    %100 = vector.extract_strided_slice %54 {offsets = [0, 0, 16], sizes = [2, 8, 8], strides = [1, 1, 1]} : vector<2x8x96xf32> to vector<2x8x8xf32>
    %101 = vector.extract_strided_slice %54 {offsets = [0, 0, 48], sizes = [2, 8, 8], strides = [1, 1, 1]} : vector<2x8x96xf32> to vector<2x8x8xf32>
    %102 = vector.extract_strided_slice %54 {offsets = [0, 0, 80], sizes = [2, 8, 8], strides = [1, 1, 1]} : vector<2x8x96xf32> to vector<2x8x8xf32>
    "tpu.trace_start"() <{level = 10 : i32, message = "bqd,bkd->bqk"}> : () -> ()
    %cst_39 = arith.constant dense<0.000000e+00> : vector<2x8x8xf32>
    %103 = tpu.matmul %100, %101, %cst_39 {dimension_numbers = #tpu.dot_dimension_numbers<[2], [2], [1], [1], [0, 0, 0, 1, 1, 1], [0], [0]>} : vector<2x8x8xf32>, vector<2x8x8xf32>, vector<2x8x8xf32> -> vector<2x8x8xf32>
    "tpu.trace_stop"() : () -> ()
    %cst_40 = arith.constant 0.353553385 : f32
    %104 = vector.broadcast %cst_40 : f32 to vector<2x8x8xf32>
    %105 = arith.mulf %103, %104 : vector<2x8x8xf32>
    %106 = arith.addf %105, %38 : vector<2x8x8xf32>
    %cst_41 = arith.constant dense<0xFF800000> : vector<2x8xf32>
    %107 = vector.multi_reduction <maximumf>, %106, %cst_41 [2] : vector<2x8x8xf32> to vector<2x8xf32>
    %108 = vector.shape_cast %107 : vector<2x8xf32> to vector<2x8x1xf32>
    %109 = vector.broadcast %108 : vector<2x8x1xf32> to vector<2x8x8xf32>
    %110 = arith.subf %106, %109 : vector<2x8x8xf32>
    %111 = math.exp %110 : vector<2x8x8xf32>
    %cst_42 = arith.constant dense<0.000000e+00> : vector<2x8xf32>
    %112 = vector.multi_reduction <add>, %111, %cst_42 [2] : vector<2x8x8xf32> to vector<2x8xf32>
    %113 = vector.shape_cast %112 : vector<2x8xf32> to vector<2x8x1xf32>
    %114 = tpu.reciprocal %113 {approx = true} : vector<2x8x1xf32> -> vector<2x8x1xf32>
    %115 = vector.broadcast %114 : vector<2x8x1xf32> to vector<2x8x8xf32>
    %116 = arith.mulf %111, %115 : vector<2x8x8xf32>
    "tpu.trace_start"() <{level = 10 : i32, message = "bqk,bkd->bqd"}> : () -> ()
    %cst_43 = arith.constant dense<0.000000e+00> : vector<2x8x8xf32>
    %117 = tpu.matmul %116, %102, %cst_43 {dimension_numbers = #tpu.dot_dimension_numbers<[2], [1], [1], [2], [0, 0, 0, 1, 1, 2], [0], [0]>} : vector<2x8x8xf32>, vector<2x8x8xf32>, vector<2x8x8xf32> -> vector<2x8x8xf32>
    "tpu.trace_stop"() : () -> ()
    %118 = vector.shape_cast %117 : vector<2x8x8xf32> to vector<16x8xf32>
    %119 = vector.extract_strided_slice %40 {offsets = [16, 0], sizes = [8, 32], strides = [1, 1]} : vector<32x32xf32> to vector<8x32xf32>
    %cst_44 = arith.constant dense<0.000000e+00> : vector<16x32xf32>
    %120 = tpu.matmul %118, %119, %cst_44 {dimension_numbers = #tpu.dot_dimension_numbers<[1], [0], [0], [1], [0, 0, 1, 1], [], []>} : vector<16x8xf32>, vector<8x32xf32>, vector<16x32xf32> -> vector<16x32xf32>
    %121 = arith.addf %99, %120 : vector<16x32xf32>
    %122 = vector.extract_strided_slice %54 {offsets = [0, 0, 24], sizes = [2, 8, 8], strides = [1, 1, 1]} : vector<2x8x96xf32> to vector<2x8x8xf32>
    %123 = vector.extract_strided_slice %54 {offsets = [0, 0, 56], sizes = [2, 8, 8], strides = [1, 1, 1]} : vector<2x8x96xf32> to vector<2x8x8xf32>
    %124 = vector.extract_strided_slice %54 {offsets = [0, 0, 88], sizes = [2, 8, 8], strides = [1, 1, 1]} : vector<2x8x96xf32> to vector<2x8x8xf32>
    "tpu.trace_start"() <{level = 10 : i32, message = "bqd,bkd->bqk"}> : () -> ()
    %cst_45 = arith.constant dense<0.000000e+00> : vector<2x8x8xf32>
    %125 = tpu.matmul %122, %123, %cst_45 {dimension_numbers = #tpu.dot_dimension_numbers<[2], [2], [1], [1], [0, 0, 0, 1, 1, 1], [0], [0]>} : vector<2x8x8xf32>, vector<2x8x8xf32>, vector<2x8x8xf32> -> vector<2x8x8xf32>
    "tpu.trace_stop"() : () -> ()
    %cst_46 = arith.constant 0.353553385 : f32
    %126 = vector.broadcast %cst_46 : f32 to vector<2x8x8xf32>
    %127 = arith.mulf %125, %126 : vector<2x8x8xf32>
    %128 = arith.addf %127, %38 : vector<2x8x8xf32>
    %cst_47 = arith.constant dense<0xFF800000> : vector<2x8xf32>
    %129 = vector.multi_reduction <maximumf>, %128, %cst_47 [2] : vector<2x8x8xf32> to vector<2x8xf32>
    %130 = vector.shape_cast %129 : vector<2x8xf32> to vector<2x8x1xf32>
    %131 = vector.broadcast %130 : vector<2x8x1xf32> to vector<2x8x8xf32>
    %132 = arith.subf %128, %131 : vector<2x8x8xf32>
    %133 = math.exp %132 : vector<2x8x8xf32>
    %cst_48 = arith.constant dense<0.000000e+00> : vector<2x8xf32>
    %134 = vector.multi_reduction <add>, %133, %cst_48 [2] : vector<2x8x8xf32> to vector<2x8xf32>
    %135 = vector.shape_cast %134 : vector<2x8xf32> to vector<2x8x1xf32>
    %136 = tpu.reciprocal %135 {approx = true} : vector<2x8x1xf32> -> vector<2x8x1xf32>
    %137 = vector.broadcast %136 : vector<2x8x1xf32> to vector<2x8x8xf32>
    %138 = arith.mulf %133, %137 : vector<2x8x8xf32>
    "tpu.trace_start"() <{level = 10 : i32, message = "bqk,bkd->bqd"}> : () -> ()
    %cst_49 = arith.constant dense<0.000000e+00> : vector<2x8x8xf32>
    %139 = tpu.matmul %138, %124, %cst_49 {dimension_numbers = #tpu.dot_dimension_numbers<[2], [1], [1], [2], [0, 0, 0, 1, 1, 2], [0], [0]>} : vector<2x8x8xf32>, vector<2x8x8xf32>, vector<2x8x8xf32> -> vector<2x8x8xf32>
    "tpu.trace_stop"() : () -> ()
    %140 = vector.shape_cast %139 : vector<2x8x8xf32> to vector<16x8xf32>
    %141 = vector.extract_strided_slice %40 {offsets = [24, 0], sizes = [8, 32], strides = [1, 1]} : vector<32x32xf32> to vector<8x32xf32>
    %cst_50 = arith.constant dense<0.000000e+00> : vector<16x32xf32>
    %142 = tpu.matmul %140, %141, %cst_50 {dimension_numbers = #tpu.dot_dimension_numbers<[1], [0], [0], [1], [0, 0, 1, 1], [], []>} : vector<16x8xf32>, vector<8x32xf32>, vector<16x32xf32> -> vector<16x32xf32>
    %143 = arith.addf %121, %142 : vector<16x32xf32>
    %144 = arith.addf %29, %143 : vector<16x32xf32>
    %cst_51 = arith.constant dense<0.000000e+00> : vector<16xf32>
    %145 = vector.multi_reduction <add>, %144, %cst_51 [1] : vector<16x32xf32> to vector<16xf32>
    %146 = vector.shape_cast %145 : vector<16xf32> to vector<16x1xf32>
    %cst_52 = arith.constant 3.200000e+01 : f32
    %147 = vector.broadcast %cst_52 : f32 to vector<16x1xf32>
    %148 = arith.divf %146, %147 : vector<16x1xf32>
    %149 = vector.broadcast %148 : vector<16x1xf32> to vector<16x32xf32>
    %150 = arith.subf %144, %149 : vector<16x32xf32>
    %151 = arith.mulf %150, %150 : vector<16x32xf32>
    %cst_53 = arith.constant dense<0.000000e+00> : vector<16xf32>
    %152 = vector.multi_reduction <add>, %151, %cst_53 [1] : vector<16x32xf32> to vector<16xf32>
    %153 = vector.shape_cast %152 : vector<16xf32> to vector<16x1xf32>
    %cst_54 = arith.constant 3.200000e+01 : f32
    %154 = vector.broadcast %cst_54 : f32 to vector<16x1xf32>
    %155 = arith.divf %153, %154 : vector<16x1xf32>
    %156 = vector.broadcast %148 : vector<16x1xf32> to vector<16x32xf32>
    %157 = arith.subf %144, %156 : vector<16x32xf32>
    %cst_55 = arith.constant 9.99999974E-6 : f32
    %158 = vector.broadcast %cst_55 : f32 to vector<16x1xf32>
    %159 = arith.addf %155, %158 : vector<16x1xf32>
    %160 = math.rsqrt %159 : vector<16x1xf32>
    %161 = vector.broadcast %160 : vector<16x1xf32> to vector<16x32xf32>
    %162 = arith.mulf %157, %161 : vector<16x32xf32>
    %163 = vector.broadcast %45 : vector<1x32xf32> to vector<16x32xf32>
    %164 = arith.mulf %162, %163 : vector<16x32xf32>
    %165 = vector.broadcast %46 : vector<1x32xf32> to vector<16x32xf32>
    %166 = arith.addf %164, %165 : vector<16x32xf32>
    %cst_56 = arith.constant dense<0.000000e+00> : vector<16x64xf32>
    %167 = tpu.matmul %166, %41, %cst_56 {dimension_numbers = #tpu.dot_dimension_numbers<[1], [0], [0], [1], [0, 0, 1, 1], [], []>} : vector<16x32xf32>, vector<32x64xf32>, vector<16x64xf32> -> vector<16x64xf32>
    %168 = vector.broadcast %49 : vector<1x64xf32> to vector<16x64xf32>
    %169 = arith.addf %167, %168 : vector<16x64xf32>
    %cst_57 = arith.constant 0.000000e+00 : f32
    %170 = vector.broadcast %cst_57 : f32 to vector<16x64xf32>
    %171 = arith.maximumf %169, %170 : vector<16x64xf32>
    %cst_58 = arith.constant dense<0.000000e+00> : vector<16x32xf32>
    %172 = tpu.matmul %171, %42, %cst_58 {dimension_numbers = #tpu.dot_dimension_numbers<[1], [0], [0], [1], [0, 0, 1, 1], [], []>} : vector<16x64xf32>, vector<64x32xf32>, vector<16x32xf32> -> vector<16x32xf32>
    %173 = vector.broadcast %50 : vector<1x32xf32> to vector<16x32xf32>
    %174 = arith.addf %172, %173 : vector<16x32xf32>
    %175 = arith.addf %166, %174 : vector<16x32xf32>
    %cst_59 = arith.constant dense<0.000000e+00> : vector<16xf32>
    %176 = vector.multi_reduction <add>, %175, %cst_59 [1] : vector<16x32xf32> to vector<16xf32>
    %177 = vector.shape_cast %176 : vector<16xf32> to vector<16x1xf32>
    %cst_60 = arith.constant 3.200000e+01 : f32
    %178 = vector.broadcast %cst_60 : f32 to vector<16x1xf32>
    %179 = arith.divf %177, %178 : vector<16x1xf32>
    %180 = vector.broadcast %179 : vector<16x1xf32> to vector<16x32xf32>
    %181 = arith.subf %175, %180 : vector<16x32xf32>
    %182 = arith.mulf %181, %181 : vector<16x32xf32>
    %cst_61 = arith.constant dense<0.000000e+00> : vector<16xf32>
    %183 = vector.multi_reduction <add>, %182, %cst_61 [1] : vector<16x32xf32> to vector<16xf32>
    %184 = vector.shape_cast %183 : vector<16xf32> to vector<16x1xf32>
    %cst_62 = arith.constant 3.200000e+01 : f32
    %185 = vector.broadcast %cst_62 : f32 to vector<16x1xf32>
    %186 = arith.divf %184, %185 : vector<16x1xf32>
    %187 = vector.broadcast %179 : vector<16x1xf32> to vector<16x32xf32>
    %188 = arith.subf %175, %187 : vector<16x32xf32>
    %cst_63 = arith.constant 9.99999974E-6 : f32
    %189 = vector.broadcast %cst_63 : f32 to vector<16x1xf32>
    %190 = arith.addf %186, %189 : vector<16x1xf32>
    %191 = math.rsqrt %190 : vector<16x1xf32>
    %192 = vector.broadcast %191 : vector<16x1xf32> to vector<16x32xf32>
    %193 = arith.mulf %188, %192 : vector<16x32xf32>
    %194 = vector.broadcast %47 : vector<1x32xf32> to vector<16x32xf32>
    %195 = arith.mulf %193, %194 : vector<16x32xf32>
    %196 = vector.broadcast %48 : vector<1x32xf32> to vector<16x32xf32>
    %197 = arith.addf %195, %196 : vector<16x32xf32>
    %c176 = arith.constant 176 : index
    %c0_64 = arith.constant 0 : index
    %198 = vector.load %arg2[%c176, %c0_64] : memref<368x96xf32, #tpu.memory_space<vmem>>, vector<32x96xf32>
    %c208 = arith.constant 208 : index
    %c0_65 = arith.constant 0 : index
    %199 = vector.load %arg2[%c208, %c0_65] : memref<368x96xf32, #tpu.memory_space<vmem>>, vector<32x32xf32>
    %c240 = arith.constant 240 : index
    %c0_66 = arith.constant 0 : index
    %200 = vector.load %arg2[%c240, %c0_66] : memref<368x96xf32, #tpu.memory_space<vmem>>, vector<32x64xf32>
    %c272 = arith.constant 272 : index
    %c0_67 = arith.constant 0 : index
    %201 = vector.load %arg2[%c272, %c0_67] : memref<368x96xf32, #tpu.memory_space<vmem>>, vector<64x32xf32>
    %c11 = arith.constant 11 : index
    %c0_68 = arith.constant 0 : index
    %202 = vector.load %arg3[%c11, %c0_68] : memref<20x96xf32, #tpu.memory_space<vmem>>, vector<1x96xf32>
    %c12 = arith.constant 12 : index
    %c0_69 = arith.constant 0 : index
    %203 = vector.load %arg3[%c12, %c0_69] : memref<20x96xf32, #tpu.memory_space<vmem>>, vector<1x32xf32>
    %c13 = arith.constant 13 : index
    %c0_70 = arith.constant 0 : index
    %204 = vector.load %arg3[%c13, %c0_70] : memref<20x96xf32, #tpu.memory_space<vmem>>, vector<1x32xf32>
    %c14 = arith.constant 14 : index
    %c0_71 = arith.constant 0 : index
    %205 = vector.load %arg3[%c14, %c0_71] : memref<20x96xf32, #tpu.memory_space<vmem>>, vector<1x32xf32>
    %c15 = arith.constant 15 : index
    %c0_72 = arith.constant 0 : index
    %206 = vector.load %arg3[%c15, %c0_72] : memref<20x96xf32, #tpu.memory_space<vmem>>, vector<1x32xf32>
    %c16_73 = arith.constant 16 : index
    %c0_74 = arith.constant 0 : index
    %207 = vector.load %arg3[%c16_73, %c0_74] : memref<20x96xf32, #tpu.memory_space<vmem>>, vector<1x32xf32>
    %c17 = arith.constant 17 : index
    %c0_75 = arith.constant 0 : index
    %208 = vector.load %arg3[%c17, %c0_75] : memref<20x96xf32, #tpu.memory_space<vmem>>, vector<1x64xf32>
    %c18 = arith.constant 18 : index
    %c0_76 = arith.constant 0 : index
    %209 = vector.load %arg3[%c18, %c0_76] : memref<20x96xf32, #tpu.memory_space<vmem>>, vector<1x32xf32>
    %cst_77 = arith.constant dense<0.000000e+00> : vector<16x96xf32>
    %210 = tpu.matmul %197, %198, %cst_77 {dimension_numbers = #tpu.dot_dimension_numbers<[1], [0], [0], [1], [0, 0, 1, 1], [], []>} : vector<16x32xf32>, vector<32x96xf32>, vector<16x96xf32> -> vector<16x96xf32>
    %211 = vector.broadcast %202 : vector<1x96xf32> to vector<16x96xf32>
    %212 = arith.addf %210, %211 : vector<16x96xf32>
    %213 = vector.shape_cast %212 : vector<16x96xf32> to vector<2x8x96xf32>
    %214 = vector.extract_strided_slice %213 {offsets = [0, 0, 0], sizes = [2, 8, 8], strides = [1, 1, 1]} : vector<2x8x96xf32> to vector<2x8x8xf32>
    %215 = vector.extract_strided_slice %213 {offsets = [0, 0, 32], sizes = [2, 8, 8], strides = [1, 1, 1]} : vector<2x8x96xf32> to vector<2x8x8xf32>
    %216 = vector.extract_strided_slice %213 {offsets = [0, 0, 64], sizes = [2, 8, 8], strides = [1, 1, 1]} : vector<2x8x96xf32> to vector<2x8x8xf32>
    "tpu.trace_start"() <{level = 10 : i32, message = "bqd,bkd->bqk"}> : () -> ()
    %cst_78 = arith.constant dense<0.000000e+00> : vector<2x8x8xf32>
    %217 = tpu.matmul %214, %215, %cst_78 {dimension_numbers = #tpu.dot_dimension_numbers<[2], [2], [1], [1], [0, 0, 0, 1, 1, 1], [0], [0]>} : vector<2x8x8xf32>, vector<2x8x8xf32>, vector<2x8x8xf32> -> vector<2x8x8xf32>
    "tpu.trace_stop"() : () -> ()
    %cst_79 = arith.constant 0.353553385 : f32
    %218 = vector.broadcast %cst_79 : f32 to vector<2x8x8xf32>
    %219 = arith.mulf %217, %218 : vector<2x8x8xf32>
    %220 = arith.addf %219, %38 : vector<2x8x8xf32>
    %cst_80 = arith.constant dense<0xFF800000> : vector<2x8xf32>
    %221 = vector.multi_reduction <maximumf>, %220, %cst_80 [2] : vector<2x8x8xf32> to vector<2x8xf32>
    %222 = vector.shape_cast %221 : vector<2x8xf32> to vector<2x8x1xf32>
    %223 = vector.broadcast %222 : vector<2x8x1xf32> to vector<2x8x8xf32>
    %224 = arith.subf %220, %223 : vector<2x8x8xf32>
    %225 = math.exp %224 : vector<2x8x8xf32>
    %cst_81 = arith.constant dense<0.000000e+00> : vector<2x8xf32>
    %226 = vector.multi_reduction <add>, %225, %cst_81 [2] : vector<2x8x8xf32> to vector<2x8xf32>
    %227 = vector.shape_cast %226 : vector<2x8xf32> to vector<2x8x1xf32>
    %228 = tpu.reciprocal %227 {approx = true} : vector<2x8x1xf32> -> vector<2x8x1xf32>
    %229 = vector.broadcast %228 : vector<2x8x1xf32> to vector<2x8x8xf32>
    %230 = arith.mulf %225, %229 : vector<2x8x8xf32>
    "tpu.trace_start"() <{level = 10 : i32, message = "bqk,bkd->bqd"}> : () -> ()
    %cst_82 = arith.constant dense<0.000000e+00> : vector<2x8x8xf32>
    %231 = tpu.matmul %230, %216, %cst_82 {dimension_numbers = #tpu.dot_dimension_numbers<[2], [1], [1], [2], [0, 0, 0, 1, 1, 2], [0], [0]>} : vector<2x8x8xf32>, vector<2x8x8xf32>, vector<2x8x8xf32> -> vector<2x8x8xf32>
    "tpu.trace_stop"() : () -> ()
    %232 = vector.shape_cast %231 : vector<2x8x8xf32> to vector<16x8xf32>
    %233 = vector.extract_strided_slice %199 {offsets = [0, 0], sizes = [8, 32], strides = [1, 1]} : vector<32x32xf32> to vector<8x32xf32>
    %cst_83 = arith.constant dense<0.000000e+00> : vector<16x32xf32>
    %234 = tpu.matmul %232, %233, %cst_83 {dimension_numbers = #tpu.dot_dimension_numbers<[1], [0], [0], [1], [0, 0, 1, 1], [], []>} : vector<16x8xf32>, vector<8x32xf32>, vector<16x32xf32> -> vector<16x32xf32>
    %235 = vector.broadcast %203 : vector<1x32xf32> to vector<16x32xf32>
    %236 = arith.addf %235, %234 : vector<16x32xf32>
    %237 = vector.extract_strided_slice %213 {offsets = [0, 0, 8], sizes = [2, 8, 8], strides = [1, 1, 1]} : vector<2x8x96xf32> to vector<2x8x8xf32>
    %238 = vector.extract_strided_slice %213 {offsets = [0, 0, 40], sizes = [2, 8, 8], strides = [1, 1, 1]} : vector<2x8x96xf32> to vector<2x8x8xf32>
    %239 = vector.extract_strided_slice %213 {offsets = [0, 0, 72], sizes = [2, 8, 8], strides = [1, 1, 1]} : vector<2x8x96xf32> to vector<2x8x8xf32>
    "tpu.trace_start"() <{level = 10 : i32, message = "bqd,bkd->bqk"}> : () -> ()
    %cst_84 = arith.constant dense<0.000000e+00> : vector<2x8x8xf32>
    %240 = tpu.matmul %237, %238, %cst_84 {dimension_numbers = #tpu.dot_dimension_numbers<[2], [2], [1], [1], [0, 0, 0, 1, 1, 1], [0], [0]>} : vector<2x8x8xf32>, vector<2x8x8xf32>, vector<2x8x8xf32> -> vector<2x8x8xf32>
    "tpu.trace_stop"() : () -> ()
    %cst_85 = arith.constant 0.353553385 : f32
    %241 = vector.broadcast %cst_85 : f32 to vector<2x8x8xf32>
    %242 = arith.mulf %240, %241 : vector<2x8x8xf32>
    %243 = arith.addf %242, %38 : vector<2x8x8xf32>
    %cst_86 = arith.constant dense<0xFF800000> : vector<2x8xf32>
    %244 = vector.multi_reduction <maximumf>, %243, %cst_86 [2] : vector<2x8x8xf32> to vector<2x8xf32>
    %245 = vector.shape_cast %244 : vector<2x8xf32> to vector<2x8x1xf32>
    %246 = vector.broadcast %245 : vector<2x8x1xf32> to vector<2x8x8xf32>
    %247 = arith.subf %243, %246 : vector<2x8x8xf32>
    %248 = math.exp %247 : vector<2x8x8xf32>
    %cst_87 = arith.constant dense<0.000000e+00> : vector<2x8xf32>
    %249 = vector.multi_reduction <add>, %248, %cst_87 [2] : vector<2x8x8xf32> to vector<2x8xf32>
    %250 = vector.shape_cast %249 : vector<2x8xf32> to vector<2x8x1xf32>
    %251 = tpu.reciprocal %250 {approx = true} : vector<2x8x1xf32> -> vector<2x8x1xf32>
    %252 = vector.broadcast %251 : vector<2x8x1xf32> to vector<2x8x8xf32>
    %253 = arith.mulf %248, %252 : vector<2x8x8xf32>
    "tpu.trace_start"() <{level = 10 : i32, message = "bqk,bkd->bqd"}> : () -> ()
    %cst_88 = arith.constant dense<0.000000e+00> : vector<2x8x8xf32>
    %254 = tpu.matmul %253, %239, %cst_88 {dimension_numbers = #tpu.dot_dimension_numbers<[2], [1], [1], [2], [0, 0, 0, 1, 1, 2], [0], [0]>} : vector<2x8x8xf32>, vector<2x8x8xf32>, vector<2x8x8xf32> -> vector<2x8x8xf32>
    "tpu.trace_stop"() : () -> ()
    %255 = vector.shape_cast %254 : vector<2x8x8xf32> to vector<16x8xf32>
    %256 = vector.extract_strided_slice %199 {offsets = [8, 0], sizes = [8, 32], strides = [1, 1]} : vector<32x32xf32> to vector<8x32xf32>
    %cst_89 = arith.constant dense<0.000000e+00> : vector<16x32xf32>
    %257 = tpu.matmul %255, %256, %cst_89 {dimension_numbers = #tpu.dot_dimension_numbers<[1], [0], [0], [1], [0, 0, 1, 1], [], []>} : vector<16x8xf32>, vector<8x32xf32>, vector<16x32xf32> -> vector<16x32xf32>
    %258 = arith.addf %236, %257 : vector<16x32xf32>
    %259 = vector.extract_strided_slice %213 {offsets = [0, 0, 16], sizes = [2, 8, 8], strides = [1, 1, 1]} : vector<2x8x96xf32> to vector<2x8x8xf32>
    %260 = vector.extract_strided_slice %213 {offsets = [0, 0, 48], sizes = [2, 8, 8], strides = [1, 1, 1]} : vector<2x8x96xf32> to vector<2x8x8xf32>
    %261 = vector.extract_strided_slice %213 {offsets = [0, 0, 80], sizes = [2, 8, 8], strides = [1, 1, 1]} : vector<2x8x96xf32> to vector<2x8x8xf32>
    "tpu.trace_start"() <{level = 10 : i32, message = "bqd,bkd->bqk"}> : () -> ()
    %cst_90 = arith.constant dense<0.000000e+00> : vector<2x8x8xf32>
    %262 = tpu.matmul %259, %260, %cst_90 {dimension_numbers = #tpu.dot_dimension_numbers<[2], [2], [1], [1], [0, 0, 0, 1, 1, 1], [0], [0]>} : vector<2x8x8xf32>, vector<2x8x8xf32>, vector<2x8x8xf32> -> vector<2x8x8xf32>
    "tpu.trace_stop"() : () -> ()
    %cst_91 = arith.constant 0.353553385 : f32
    %263 = vector.broadcast %cst_91 : f32 to vector<2x8x8xf32>
    %264 = arith.mulf %262, %263 : vector<2x8x8xf32>
    %265 = arith.addf %264, %38 : vector<2x8x8xf32>
    %cst_92 = arith.constant dense<0xFF800000> : vector<2x8xf32>
    %266 = vector.multi_reduction <maximumf>, %265, %cst_92 [2] : vector<2x8x8xf32> to vector<2x8xf32>
    %267 = vector.shape_cast %266 : vector<2x8xf32> to vector<2x8x1xf32>
    %268 = vector.broadcast %267 : vector<2x8x1xf32> to vector<2x8x8xf32>
    %269 = arith.subf %265, %268 : vector<2x8x8xf32>
    %270 = math.exp %269 : vector<2x8x8xf32>
    %cst_93 = arith.constant dense<0.000000e+00> : vector<2x8xf32>
    %271 = vector.multi_reduction <add>, %270, %cst_93 [2] : vector<2x8x8xf32> to vector<2x8xf32>
    %272 = vector.shape_cast %271 : vector<2x8xf32> to vector<2x8x1xf32>
    %273 = tpu.reciprocal %272 {approx = true} : vector<2x8x1xf32> -> vector<2x8x1xf32>
    %274 = vector.broadcast %273 : vector<2x8x1xf32> to vector<2x8x8xf32>
    %275 = arith.mulf %270, %274 : vector<2x8x8xf32>
    "tpu.trace_start"() <{level = 10 : i32, message = "bqk,bkd->bqd"}> : () -> ()
    %cst_94 = arith.constant dense<0.000000e+00> : vector<2x8x8xf32>
    %276 = tpu.matmul %275, %261, %cst_94 {dimension_numbers = #tpu.dot_dimension_numbers<[2], [1], [1], [2], [0, 0, 0, 1, 1, 2], [0], [0]>} : vector<2x8x8xf32>, vector<2x8x8xf32>, vector<2x8x8xf32> -> vector<2x8x8xf32>
    "tpu.trace_stop"() : () -> ()
    %277 = vector.shape_cast %276 : vector<2x8x8xf32> to vector<16x8xf32>
    %278 = vector.extract_strided_slice %199 {offsets = [16, 0], sizes = [8, 32], strides = [1, 1]} : vector<32x32xf32> to vector<8x32xf32>
    %cst_95 = arith.constant dense<0.000000e+00> : vector<16x32xf32>
    %279 = tpu.matmul %277, %278, %cst_95 {dimension_numbers = #tpu.dot_dimension_numbers<[1], [0], [0], [1], [0, 0, 1, 1], [], []>} : vector<16x8xf32>, vector<8x32xf32>, vector<16x32xf32> -> vector<16x32xf32>
    %280 = arith.addf %258, %279 : vector<16x32xf32>
    %281 = vector.extract_strided_slice %213 {offsets = [0, 0, 24], sizes = [2, 8, 8], strides = [1, 1, 1]} : vector<2x8x96xf32> to vector<2x8x8xf32>
    %282 = vector.extract_strided_slice %213 {offsets = [0, 0, 56], sizes = [2, 8, 8], strides = [1, 1, 1]} : vector<2x8x96xf32> to vector<2x8x8xf32>
    %283 = vector.extract_strided_slice %213 {offsets = [0, 0, 88], sizes = [2, 8, 8], strides = [1, 1, 1]} : vector<2x8x96xf32> to vector<2x8x8xf32>
    "tpu.trace_start"() <{level = 10 : i32, message = "bqd,bkd->bqk"}> : () -> ()
    %cst_96 = arith.constant dense<0.000000e+00> : vector<2x8x8xf32>
    %284 = tpu.matmul %281, %282, %cst_96 {dimension_numbers = #tpu.dot_dimension_numbers<[2], [2], [1], [1], [0, 0, 0, 1, 1, 1], [0], [0]>} : vector<2x8x8xf32>, vector<2x8x8xf32>, vector<2x8x8xf32> -> vector<2x8x8xf32>
    "tpu.trace_stop"() : () -> ()
    %cst_97 = arith.constant 0.353553385 : f32
    %285 = vector.broadcast %cst_97 : f32 to vector<2x8x8xf32>
    %286 = arith.mulf %284, %285 : vector<2x8x8xf32>
    %287 = arith.addf %286, %38 : vector<2x8x8xf32>
    %cst_98 = arith.constant dense<0xFF800000> : vector<2x8xf32>
    %288 = vector.multi_reduction <maximumf>, %287, %cst_98 [2] : vector<2x8x8xf32> to vector<2x8xf32>
    %289 = vector.shape_cast %288 : vector<2x8xf32> to vector<2x8x1xf32>
    %290 = vector.broadcast %289 : vector<2x8x1xf32> to vector<2x8x8xf32>
    %291 = arith.subf %287, %290 : vector<2x8x8xf32>
    %292 = math.exp %291 : vector<2x8x8xf32>
    %cst_99 = arith.constant dense<0.000000e+00> : vector<2x8xf32>
    %293 = vector.multi_reduction <add>, %292, %cst_99 [2] : vector<2x8x8xf32> to vector<2x8xf32>
    %294 = vector.shape_cast %293 : vector<2x8xf32> to vector<2x8x1xf32>
    %295 = tpu.reciprocal %294 {approx = true} : vector<2x8x1xf32> -> vector<2x8x1xf32>
    %296 = vector.broadcast %295 : vector<2x8x1xf32> to vector<2x8x8xf32>
    %297 = arith.mulf %292, %296 : vector<2x8x8xf32>
    "tpu.trace_start"() <{level = 10 : i32, message = "bqk,bkd->bqd"}> : () -> ()
    %cst_100 = arith.constant dense<0.000000e+00> : vector<2x8x8xf32>
    %298 = tpu.matmul %297, %283, %cst_100 {dimension_numbers = #tpu.dot_dimension_numbers<[2], [1], [1], [2], [0, 0, 0, 1, 1, 2], [0], [0]>} : vector<2x8x8xf32>, vector<2x8x8xf32>, vector<2x8x8xf32> -> vector<2x8x8xf32>
    "tpu.trace_stop"() : () -> ()
    %299 = vector.shape_cast %298 : vector<2x8x8xf32> to vector<16x8xf32>
    %300 = vector.extract_strided_slice %199 {offsets = [24, 0], sizes = [8, 32], strides = [1, 1]} : vector<32x32xf32> to vector<8x32xf32>
    %cst_101 = arith.constant dense<0.000000e+00> : vector<16x32xf32>
    %301 = tpu.matmul %299, %300, %cst_101 {dimension_numbers = #tpu.dot_dimension_numbers<[1], [0], [0], [1], [0, 0, 1, 1], [], []>} : vector<16x8xf32>, vector<8x32xf32>, vector<16x32xf32> -> vector<16x32xf32>
    %302 = arith.addf %280, %301 : vector<16x32xf32>
    %303 = arith.addf %197, %302 : vector<16x32xf32>
    %cst_102 = arith.constant dense<0.000000e+00> : vector<16xf32>
    %304 = vector.multi_reduction <add>, %303, %cst_102 [1] : vector<16x32xf32> to vector<16xf32>
    %305 = vector.shape_cast %304 : vector<16xf32> to vector<16x1xf32>
    %cst_103 = arith.constant 3.200000e+01 : f32
    %306 = vector.broadcast %cst_103 : f32 to vector<16x1xf32>
    %307 = arith.divf %305, %306 : vector<16x1xf32>
    %308 = vector.broadcast %307 : vector<16x1xf32> to vector<16x32xf32>
    %309 = arith.subf %303, %308 : vector<16x32xf32>
    %310 = arith.mulf %309, %309 : vector<16x32xf32>
    %cst_104 = arith.constant dense<0.000000e+00> : vector<16xf32>
    %311 = vector.multi_reduction <add>, %310, %cst_104 [1] : vector<16x32xf32> to vector<16xf32>
    %312 = vector.shape_cast %311 : vector<16xf32> to vector<16x1xf32>
    %cst_105 = arith.constant 3.200000e+01 : f32
    %313 = vector.broadcast %cst_105 : f32 to vector<16x1xf32>
    %314 = arith.divf %312, %313 : vector<16x1xf32>
    %315 = vector.broadcast %307 : vector<16x1xf32> to vector<16x32xf32>
    %316 = arith.subf %303, %315 : vector<16x32xf32>
    %cst_106 = arith.constant 9.99999974E-6 : f32
    %317 = vector.broadcast %cst_106 : f32 to vector<16x1xf32>
    %318 = arith.addf %314, %317 : vector<16x1xf32>
    %319 = math.rsqrt %318 : vector<16x1xf32>
    %320 = vector.broadcast %319 : vector<16x1xf32> to vector<16x32xf32>
    %321 = arith.mulf %316, %320 : vector<16x32xf32>
    %322 = vector.broadcast %204 : vector<1x32xf32> to vector<16x32xf32>
    %323 = arith.mulf %321, %322 : vector<16x32xf32>
    %324 = vector.broadcast %205 : vector<1x32xf32> to vector<16x32xf32>
    %325 = arith.addf %323, %324 : vector<16x32xf32>
    %cst_107 = arith.constant dense<0.000000e+00> : vector<16x64xf32>
    %326 = tpu.matmul %325, %200, %cst_107 {dimension_numbers = #tpu.dot_dimension_numbers<[1], [0], [0], [1], [0, 0, 1, 1], [], []>} : vector<16x32xf32>, vector<32x64xf32>, vector<16x64xf32> -> vector<16x64xf32>
    %327 = vector.broadcast %208 : vector<1x64xf32> to vector<16x64xf32>
    %328 = arith.addf %326, %327 : vector<16x64xf32>
    %cst_108 = arith.constant 0.000000e+00 : f32
    %329 = vector.broadcast %cst_108 : f32 to vector<16x64xf32>
    %330 = arith.maximumf %328, %329 : vector<16x64xf32>
    %cst_109 = arith.constant dense<0.000000e+00> : vector<16x32xf32>
    %331 = tpu.matmul %330, %201, %cst_109 {dimension_numbers = #tpu.dot_dimension_numbers<[1], [0], [0], [1], [0, 0, 1, 1], [], []>} : vector<16x64xf32>, vector<64x32xf32>, vector<16x32xf32> -> vector<16x32xf32>
    %332 = vector.broadcast %209 : vector<1x32xf32> to vector<16x32xf32>
    %333 = arith.addf %331, %332 : vector<16x32xf32>
    %334 = arith.addf %325, %333 : vector<16x32xf32>
    %cst_110 = arith.constant dense<0.000000e+00> : vector<16xf32>
    %335 = vector.multi_reduction <add>, %334, %cst_110 [1] : vector<16x32xf32> to vector<16xf32>
    %336 = vector.shape_cast %335 : vector<16xf32> to vector<16x1xf32>
    %cst_111 = arith.constant 3.200000e+01 : f32
    %337 = vector.broadcast %cst_111 : f32 to vector<16x1xf32>
    %338 = arith.divf %336, %337 : vector<16x1xf32>
    %339 = vector.broadcast %338 : vector<16x1xf32> to vector<16x32xf32>
    %340 = arith.subf %334, %339 : vector<16x32xf32>
    %341 = arith.mulf %340, %340 : vector<16x32xf32>
    %cst_112 = arith.constant dense<0.000000e+00> : vector<16xf32>
    %342 = vector.multi_reduction <add>, %341, %cst_112 [1] : vector<16x32xf32> to vector<16xf32>
    %343 = vector.shape_cast %342 : vector<16xf32> to vector<16x1xf32>
    %cst_113 = arith.constant 3.200000e+01 : f32
    %344 = vector.broadcast %cst_113 : f32 to vector<16x1xf32>
    %345 = arith.divf %343, %344 : vector<16x1xf32>
    %346 = vector.broadcast %338 : vector<16x1xf32> to vector<16x32xf32>
    %347 = arith.subf %334, %346 : vector<16x32xf32>
    %cst_114 = arith.constant 9.99999974E-6 : f32
    %348 = vector.broadcast %cst_114 : f32 to vector<16x1xf32>
    %349 = arith.addf %345, %348 : vector<16x1xf32>
    %350 = math.rsqrt %349 : vector<16x1xf32>
    %351 = vector.broadcast %350 : vector<16x1xf32> to vector<16x32xf32>
    %352 = arith.mulf %347, %351 : vector<16x32xf32>
    %353 = vector.broadcast %206 : vector<1x32xf32> to vector<16x32xf32>
    %354 = arith.mulf %352, %353 : vector<16x32xf32>
    %355 = vector.broadcast %207 : vector<1x32xf32> to vector<16x32xf32>
    %356 = arith.addf %354, %355 : vector<16x32xf32>
    %c336 = arith.constant 336 : index
    %c0_115 = arith.constant 0 : index
    %357 = vector.load %arg2[%c336, %c0_115] : memref<368x96xf32, #tpu.memory_space<vmem>>, vector<32x8xf32>
    %cst_116 = arith.constant dense<0.000000e+00> : vector<16x8xf32>
    %358 = tpu.matmul %356, %357, %cst_116 {dimension_numbers = #tpu.dot_dimension_numbers<[1], [0], [0], [1], [0, 0, 1, 1], [], []>} : vector<16x32xf32>, vector<32x8xf32>, vector<16x8xf32> -> vector<16x8xf32>
    %c19 = arith.constant 19 : index
    %c0_117 = arith.constant 0 : index
    %359 = vector.load %arg3[%c19, %c0_117] : memref<20x96xf32, #tpu.memory_space<vmem>>, vector<1x8xf32>
    %360 = vector.broadcast %359 : vector<1x8xf32> to vector<16x8xf32>
    %361 = arith.addf %358, %360 : vector<16x8xf32>
    %362 = arith.negf %361 : vector<16x8xf32>
    %363 = math.exp %362 : vector<16x8xf32>
    %cst_118 = arith.constant 1.000000e+00 : f32
    %364 = vector.broadcast %cst_118 : f32 to vector<16x8xf32>
    %365 = arith.addf %364, %363 : vector<16x8xf32>
    %366 = arith.divf %364, %365 : vector<16x8xf32>
    %c0_119 = arith.constant 0 : index
    %c0_120 = arith.constant 0 : index
    %367 = vector.load %arg4[%c0_119, %c0_120] : memref<16x8xf32, #tpu.memory_space<vmem>>, vector<16x8xf32>
    tpu.vector_store %arg4[%c0_119, %c0_120], %366 {strides = array<i32>} : memref<16x8xf32, #tpu.memory_space<vmem>>, vector<16x8xf32>,
    return
  }
  func.func @transform_0(%arg0: i32) -> (i32, i32) {
    %c0_i32 = arith.constant 0 : i32
    %c0_i32_0 = arith.constant 0 : i32
    return %arg0, %c0_i32 : i32, i32
  }
  func.func @transform_1(%arg0: i32) -> (i32, i32) {
    %c0_i32 = arith.constant 0 : i32
    %c0_i32_0 = arith.constant 0 : i32
    %c0_i32_1 = arith.constant 0 : i32
    return %c0_i32, %c0_i32_0 : i32, i32
  }
  func.func @transform_2(%arg0: i32) -> (i32, i32) {
    %c0_i32 = arith.constant 0 : i32
    %c0_i32_0 = arith.constant 0 : i32
    %c0_i32_1 = arith.constant 0 : i32
    return %c0_i32, %c0_i32_0 : i32, i32
  }
  func.func @transform_3(%arg0: i32) -> (i32, i32) {
    %c0_i32 = arith.constant 0 : i32
    %c0_i32_0 = arith.constant 0 : i32
    return %arg0, %c0_i32 : i32, i32
  }
}

</mosaic_0001>

<llo_original>
// kernel: tpu_custom_call.1
$region0: #{tpu_custom_call.1}
  #allocation0 [shape = 'u32[]', space=smem, size = 0x4, offset = 0x4, fixed_abs, tag = 'smem constant byte address 0x4 - core index']
  #allocation1 [shape = 'u32[72,128]{1,0:T(1,128)}', space=vmem, size = 0x9000, scoped, tag = 'internal scratch']
  %s0 = inlined_call_operand.vmem [shape: f32[16,16], index: 0, kind: input, shape index: {}]
  %s1 = inlined_call_operand.vmem [shape: f32[368,96], index: 1, kind: input, shape index: {}]
  %s2 = inlined_call_operand.vmem [shape: f32[20,96], index: 2, kind: input, shape index: {}]
  %s3 = inlined_call_operand.vmem [shape: f32[16,8], index: 3, kind: output, shape index: {}]
  %s4 = sld [smem:[#allocation0]]
  $region22: #{tpu_custom_call.1} parent=0
    _
  %s6 = ssub.s32 1, %s4
  %s7 = scalar_select 0, %s6, %s4
  // Predicated region
  $region2: #{tpu_custom_call.1} parent=0 // pred_check
    _
  $region3: #{tpu_custom_call.1} parent=0 // pred_check_branch
    %9 = sbr.rel (0) target = $region5
  $region4: #{tpu_custom_call.1} parent=0 // pred_region
    _
  $region5: #{tpu_custom_call.1} parent=0 // pred_fallthru
    _
  // Predicated region
  $region6: #{tpu_custom_call.1} parent=0 // pred_check
    _
  $region7: #{tpu_custom_call.1} parent=0 // pred_check_branch
    %11 = sbr.rel (0) target = $region9
  $region8: #{tpu_custom_call.1} parent=0 // pred_region
    _
  $region9: #{tpu_custom_call.1} parent=0 // pred_fallthru
    _
  // Predicated region
  $region10: #{tpu_custom_call.1} parent=0 // pred_check
    _
  $region11: #{tpu_custom_call.1} parent=0 // pred_check_branch
    %13 = sbr.rel (0) target = $region13
  $region12: #{tpu_custom_call.1} parent=0 // pred_region
    _
  $region13: #{tpu_custom_call.1} parent=0 // pred_fallthru
    _
  %v14 = vld [vmem:[%s0] sm:$0xff]
  %v15 = vld [vmem:[%s0 + $0x8] sm:$0xff]
  %v16 = vld [vmem:[%s1] sm:$0xff]
  %v17 = vld [vmem:[%s1 + $0x8] sm:$0xff]
  %v18 = vld [vmem:[%s2] sm:$0x1]
  %v19 = vperm.slane %v18, 0
  %vm20 = vcmask 130048
  %v22 = vsel %vm20, %v14, 0
  %v25 = vsel %vm20, %v15, 0
  %27 = vmatpush.msra.mxu0 0.0
  %28 = vmatpush.msra.mxu0 0.0
  %29 = vmatpush.msra.mxu0 0.0
  %30 = vmatpush.msra.mxu0 0.0
  %31 = vmatpush.msra.mxu0 0.0
  %32 = vmatpush.msra.mxu0 0.0
  %33 = vmatpush.msra.mxu0 0.0
  %34 = vmatpush.msra.mxu0 0.0
  %35 = vmatpush.msra.mxu0 0.0
  %36 = vmatpush.msra.mxu0 0.0
  %37 = vmatpush.msra.mxu0 0.0
  %38 = vmatpush.msra.mxu0 0.0
  %39 = vmatpush.msra.mxu0 0.0
  %40 = vmatpush.msra.mxu0 0.0
  %41 = vmatpush.msra.mxu0 %v17
  %42 = vmatpush.msra.mxu0 %v16
  %43 = vmatmul.f32.gmra.mxu0 %v22
  %v44 = vpop.f32.mrf.mxu0
  %v45 = vadd.f32 %v19, %v44
  %46 = vmatmul.f32.gmra.mxu0 %v25
  %v47 = vpop.f32.mrf.mxu0
  %v48 = vadd.f32 %v19, %v47
  %49 = vdwg.mxu0
  %v50 = vld [vmem:[%s2 + $0x1] sm:$0x1]
  %v51 = vld [vmem:[%s2 + $0x2] sm:$0x1]
  %vm52 = vcmask 261120
  %v53 = vsel %vm52, %v45, 0.0
  %54 = vadd.xlane.f32.xlu0 %v53
  %v55 = vpop.xlane.xlu0 %54
  %v56 = vsel %vm52, %v48, 0.0
  %57 = vadd.xlane.f32.xlu0 %v56
  %v58 = vpop.xlane.xlu0 %57
  %v59 = vrcp.pop 32.0
  %v60 = vmul.f32 32.0, %v59
  %v61 = vsub.f32 1.0, %v60
  %v62 = vmul.f32 %v59, %v61
  %v63 = vadd.f32 %v59, %v62
  %vm64 = vweird.f32 %v59
  %v65 = vsel %vm64, %v59, %v63
  %v66 = vmul.f32 %v55, %v65
  %v67 = vmul.f32 %v58, %v65
  %v68 = vsub.f32 %v45, %v66
  %v69 = vsub.f32 %v48, %v67
  %v70 = vmul.f32 %v68, %v68
  %v71 = vmul.f32 %v69, %v69
  %v72 = vsel %vm52, %v70, 0.0
  %73 = vadd.xlane.f32.xlu0 %v72
  %v74 = vpop.xlane.xlu0 %73
  %v75 = vsel %vm52, %v71, 0.0
  %76 = vadd.xlane.f32.xlu0 %v75
  %v77 = vpop.xlane.xlu0 %76
  %v78 = vmul.f32 %v74, %v65
  %v79 = vmul.f32 %v77, %v65
  %v80 = vadd.f32 %v78, 1e-05
  %v81 = vadd.f32 %v79, 1e-05
  %v82 = vrsqrt.pop %v80
  %v83 = vmul.f32 %v82, %v80
  %v84 = vmul.f32 %v83, %v82
  %v85 = vmul.f32 0.5, %v84
  %v86 = vsub.f32 1.5, %v85
  %v87 = vmul.f32 %v82, %v86
  %vm88 = vweird.f32 %v80
  %vm89 = vweird.f32 %v82
  %vm90 = vmor %vm88, %vm89
  %v91 = vsel %vm90, %v82, %v87
  %v92 = vrsqrt.pop %v81
  %v93 = vmul.f32 %v92, %v81
  %v94 = vmul.f32 %v93, %v92
  %v95 = vmul.f32 0.5, %v94
  %v96 = vsub.f32 1.5, %v95
  %v97 = vmul.f32 %v92, %v96
  %vm98 = vweird.f32 %v81
  %vm99 = vweird.f32 %v92
  %vm100 = vmor %vm98, %vm99
  %v101 = vsel %vm100, %v92, %v97
  %v102 = vmul.f32 %v68, %v91
  %v103 = vmul.f32 %v69, %v101
  %v104 = vperm.slane %v50, 0
  %v105 = vmul.f32 %v102, %v104
  %v106 = vmul.f32 %v103, %v104
  %v107 = vperm.slane %v51, 0
  %v108 = vadd.f32 %v105, %v107
  %v109 = vadd.f32 %v106, %v107
  %v110 = vlaneseq
  %v111 = vshrl.u32 %v110, 7
  %v112 = vlaneseq
  %v113 = vand.u32 %v112, 127
  %vm114 = vcmp.gt.s32.totalorder %v113, %v111
  %v115 = vsel %vm114, -1e+30, 0.0
  %v116 = vld [vmem:[%s1 + $0x10] sm:$0xff]
  %v117 = vld [vmem:[%s1 + $0x18] sm:$0xff]
  %v118 = vld [vmem:[%s1 + $0x20] sm:$0xff]
  %v119 = vld [vmem:[%s1 + $0x28] sm:$0xff]
  %v120 = vld [vmem:[%s1 + $0x30] sm:$0xff]
  %v121 = vld [vmem:[%s1 + $0x38] sm:$0xff]
  %v122 = vld [vmem:[%s1 + $0x40] sm:$0xff]
  %v123 = vld [vmem:[%s1 + $0x48] sm:$0xff]
  %v124 = vld [vmem:[%s1 + $0x50] sm:$0xff]
  %v125 = vld [vmem:[%s1 + $0x58] sm:$0xff]
  %v126 = vld [vmem:[%s1 + $0x60] sm:$0xff]
  %v127 = vld [vmem:[%s1 + $0x68] sm:$0xff]
  %v128 = vld [vmem:[%s1 + $0x70] sm:$0xff]
  %v129 = vld [vmem:[%s1 + $0x78] sm:$0xff]
  %v130 = vld [vmem:[%s1 + $0x80] sm:$0xff]
  %v131 = vld [vmem:[%s1 + $0x88] sm:$0xff]
  %v132 = vld [vmem:[%s1 + $0x90] sm:$0xff]
  %v133 = vld [vmem:[%s1 + $0x98] sm:$0xff]
  %v134 = vld [vmem:[%s1 + $0xa0] sm:$0xff]
  %v135 = vld [vmem:[%s1 + $0xa8] sm:$0xff]
  %v136 = vld [vmem:[%s2 + $0x3] sm:$0x1]
  %v137 = vld [vmem:[%s2 + $0x4] sm:$0x1]
  %v138 = vld [vmem:[%s2 + $0x5] sm:$0x1]
  %v139 = vld [vmem:[%s2 + $0x6] sm:$0x1]
  %v140 = vld [vmem:[%s2 + $0x7] sm:$0x1]
  %v141 = vld [vmem:[%s2 + $0x8] sm:$0x1]
  %v142 = vld [vmem:[%s2 + $0x9] sm:$0x1]
  %v143 = vld [vmem:[%s2 + $0xa] sm:$0x1]
  %v144 = vperm.slane %v136, 0
  %v146 = vsel %vm52, %v108, 0
  %v149 = vsel %vm52, %v109, 0
  %151 = vmatpush.msra.mxu0 0.0
  %152 = vmatpush.msra.mxu0 0.0
  %153 = vmatpush.msra.mxu0 0.0
  %154 = vmatpush.msra.mxu0 0.0
  %155 = vmatpush.msra.mxu0 0.0
  %156 = vmatpush.msra.mxu0 0.0
  %157 = vmatpush.msra.mxu0 0.0
  %158 = vmatpush.msra.mxu0 0.0
  %159 = vmatpush.msra.mxu0 0.0
  %160 = vmatpush.msra.mxu0 0.0
  %161 = vmatpush.msra.mxu0 0.0
  %162 = vmatpush.msra.mxu0 0.0
  %163 = vmatpush.msra.mxu0 %v119
  %164 = vmatpush.msra.mxu0 %v118
  %165 = vmatpush.msra.mxu0 %v117
  %166 = vmatpush.msra.mxu0 %v116
  %167 = vmatmul.f32.gmra.mxu0 %v146
  %v168 = vpop.f32.mrf.mxu0
  %v169 = vadd.f32 %v144, %v168
  %170 = vmatmul.f32.gmra.mxu0 %v149
  %v171 = vpop.f32.mrf.mxu0
  %v172 = vadd.f32 %v144, %v171
  %173 = vdwg.mxu0
  %175 = vrot.lane.b32.xlu0 %v169, 96
  %v176 = vpop.permute.xlu0 %175
  %vm177 = vcmask 64512
  %v178 = vsel %vm177, %v169, 0
  %v180 = vsel %vm177, %v176, 0
  %182 = vmatpush.xpose.msra.mxu0 0.0
  %183 = vmatpush.xpose.msra.mxu0 0.0
  %184 = vmatpush.xpose.msra.mxu0 0.0
  %185 = vmatpush.xpose.msra.mxu0 0.0
  %186 = vmatpush.xpose.msra.mxu0 0.0
  %187 = vmatpush.xpose.msra.mxu0 0.0
  %188 = vmatpush.xpose.msra.mxu0 0.0
  %189 = vmatpush.xpose.msra.mxu0 0.0
  %190 = vmatpush.xpose.msra.mxu0 0.0
  %191 = vmatpush.xpose.msra.mxu0 0.0
  %192 = vmatpush.xpose.msra.mxu0 0.0
  %193 = vmatpush.xpose.msra.mxu0 0.0
  %194 = vmatpush.xpose.msra.mxu0 0.0
  %195 = vmatpush.xpose.msra.mxu0 0.0
  %196 = vmatpush.xpose.msra.mxu0 0.0
  %197 = vmatpush.xpose.msra.mxu0 %v180
  %198 = vmatmul.f32.gmra.mxu0 %v178
  %v199 = vpop.f32.mrf.mxu0
  %v200 = vadd.f32 0.0, %v199
  %201 = vdwg.mxu0
  %203 = vrot.lane.b32.xlu0 %v172, 96
  %v204 = vpop.permute.xlu0 %203
  %v205 = vsel %vm177, %v172, 0
  %v207 = vsel %vm177, %v204, 0
  %209 = vmatpush.xpose.msra.mxu0 0.0
  %210 = vmatpush.xpose.msra.mxu0 0.0
  %211 = vmatpush.xpose.msra.mxu0 0.0
  %212 = vmatpush.xpose.msra.mxu0 0.0
  %213 = vmatpush.xpose.msra.mxu0 0.0
  %214 = vmatpush.xpose.msra.mxu0 0.0
  %215 = vmatpush.xpose.msra.mxu0 0.0
  %216 = vmatpush.xpose.msra.mxu0 0.0
  %217 = vmatpush.xpose.msra.mxu0 0.0
  %218 = vmatpush.xpose.msra.mxu0 0.0
  %219 = vmatpush.xpose.msra.mxu0 0.0
  %220 = vmatpush.xpose.msra.mxu0 0.0
  %221 = vmatpush.xpose.msra.mxu0 0.0
  %222 = vmatpush.xpose.msra.mxu0 0.0
  %223 = vmatpush.xpose.msra.mxu0 0.0
  %224 = vmatpush.xpose.msra.mxu0 %v207
  %225 = vmatmul.f32.gmra.mxu0 %v205
  %v226 = vpop.f32.mrf.mxu0
  %v227 = vadd.f32 0.0, %v226
  %228 = vdwg.mxu0
  %v229 = vmul.f32 %v200, 0.35355338
  %v230 = vmul.f32 %v227, 0.35355338
  %v231 = vadd.f32 %v229, %v115
  %v232 = vadd.f32 %v230, %v115
  %v233 = vsel %vm177, %v231, -inf
  %234 = vmax.xlane.f32.xlu0 %v233
  %v235 = vpop.xlane.xlu0 %234
  %v236 = vsel %vm177, %v232, -inf
  %237 = vmax.xlane.f32.xlu0 %v236
  %v238 = vpop.xlane.xlu0 %237
  %v239 = vsub.f32 %v231, %v235
  %v240 = vsub.f32 %v232, %v238
  %v241 = vmul.f32 %v239, 1.442695
  %v242 = vpow.pop %v241
  %v243 = vmul.f32 %v240, 1.442695
  %v244 = vpow.pop %v243
  %v245 = vsel %vm177, %v242, 0.0
  %246 = vadd.xlane.f32.xlu0 %v245
  %v247 = vpop.xlane.xlu0 %246
  %v248 = vsel %vm177, %v244, 0.0
  %249 = vadd.xlane.f32.xlu0 %v248
  %v250 = vpop.xlane.xlu0 %249
  %v251 = vrcp.pop %v247
  %v252 = vrcp.pop %v250
  %v253 = vmul.f32 %v242, %v251
  %v254 = vmul.f32 %v244, %v252
  %255 = vrot.lane.b32.xlu0 %v169, 64
  %v256 = vpop.permute.xlu0 %255
  %v259 = vsel %vm177, %v253, 0
  %261 = vmatpush.msra.mxu0 0.0
  %262 = vmatpush.msra.mxu0 0.0
  %263 = vmatpush.msra.mxu0 0.0
  %264 = vmatpush.msra.mxu0 0.0
  %265 = vmatpush.msra.mxu0 0.0
  %266 = vmatpush.msra.mxu0 0.0
  %267 = vmatpush.msra.mxu0 0.0
  %268 = vmatpush.msra.mxu0 0.0
  %269 = vmatpush.msra.mxu0 0.0
  %270 = vmatpush.msra.mxu0 0.0
  %271 = vmatpush.msra.mxu0 0.0
  %272 = vmatpush.msra.mxu0 0.0
  %273 = vmatpush.msra.mxu0 0.0
  %274 = vmatpush.msra.mxu0 0.0
  %275 = vmatpush.msra.mxu0 0.0
  %276 = vmatpush.msra.mxu0 %v256
  %277 = vmatmul.f32.gmra.mxu0 %v259
  %v278 = vpop.f32.mrf.mxu0
  %v279 = vadd.f32 0.0, %v278
  %280 = vdwg.mxu0
  %281 = vrot.lane.b32.xlu0 %v172, 64
  %v282 = vpop.permute.xlu0 %281
  %v285 = vsel %vm177, %v254, 0
  %287 = vmatpush.msra.mxu0 0.0
  %288 = vmatpush.msra.mxu0 0.0
  %289 = vmatpush.msra.mxu0 0.0
  %290 = vmatpush.msra.mxu0 0.0
  %291 = vmatpush.msra.mxu0 0.0
  %292 = vmatpush.msra.mxu0 0.0
  %293 = vmatpush.msra.mxu0 0.0
  %294 = vmatpush.msra.mxu0 0.0
  %295 = vmatpush.msra.mxu0 0.0
  %296 = vmatpush.msra.mxu0 0.0
  %297 = vmatpush.msra.mxu0 0.0
  %298 = vmatpush.msra.mxu0 0.0
  %299 = vmatpush.msra.mxu0 0.0
  %300 = vmatpush.msra.mxu0 0.0
  %301 = vmatpush.msra.mxu0 0.0
  %302 = vmatpush.msra.mxu0 %v282
  %303 = vmatmul.f32.gmra.mxu0 %v285
  %v304 = vpop.f32.mrf.mxu0
  %v305 = vadd.f32 0.0, %v304
  %306 = vdwg.mxu0
  %v308 = vsel %vm177, %v279, 0
  %v311 = vsel %vm177, %v305, 0
  %313 = vmatpush.msra.mxu0 0.0
  %314 = vmatpush.msra.mxu0 0.0
  %315 = vmatpush.msra.mxu0 0.0
  %316 = vmatpush.msra.mxu0 0.0
  %317 = vmatpush.msra.mxu0 0.0
  %318 = vmatpush.msra.mxu0 0.0
  %319 = vmatpush.msra.mxu0 0.0
  %320 = vmatpush.msra.mxu0 0.0
  %321 = vmatpush.msra.mxu0 0.0
  %322 = vmatpush.msra.mxu0 0.0
  %323 = vmatpush.msra.mxu0 0.0
  %324 = vmatpush.msra.mxu0 0.0
  %325 = vmatpush.msra.mxu0 0.0
  %326 = vmatpush.msra.mxu0 0.0
  %327 = vmatpush.msra.mxu0 0.0
  %328 = vmatpush.msra.mxu0 %v120
  %329 = vmatmul.f32.gmra.mxu0 %v308
  %v330 = vpop.f32.mrf.mxu0
  %v331 = vadd.f32 0.0, %v330
  %332 = vmatmul.f32.gmra.mxu0 %v311
  %v333 = vpop.f32.mrf.mxu0
  %v334 = vadd.f32 0.0, %v333
  %335 = vdwg.mxu0
  %v336 = vperm.slane %v137, 0
  %v337 = vadd.f32 %v336, %v331
  %v338 = vadd.f32 %v336, %v334
  %339 = vrot.lane.b32.xlu0 %v169, 120
  %v340 = vpop.permute.xlu0 %339
  %341 = vrot.lane.b32.xlu0 %v169, 88
  %v342 = vpop.permute.xlu0 %341
  %v343 = vsel %vm177, %v340, 0
  %v345 = vsel %vm177, %v342, 0
  %347 = vmatpush.xpose.msra.mxu0 0.0
  %348 = vmatpush.xpose.msra.mxu0 0.0
  %349 = vmatpush.xpose.msra.mxu0 0.0
  %350 = vmatpush.xpose.msra.mxu0 0.0
  %351 = vmatpush.xpose.msra.mxu0 0.0
  %352 = vmatpush.xpose.msra.mxu0 0.0
  %353 = vmatpush.xpose.msra.mxu0 0.0
  %354 = vmatpush.xpose.msra.mxu0 0.0
  %355 = vmatpush.xpose.msra.mxu0 0.0
  %356 = vmatpush.xpose.msra.mxu0 0.0
  %357 = vmatpush.xpose.msra.mxu0 0.0
  %358 = vmatpush.xpose.msra.mxu0 0.0
  %359 = vmatpush.xpose.msra.mxu0 0.0
  %360 = vmatpush.xpose.msra.mxu0 0.0
  %361 = vmatpush.xpose.msra.mxu0 0.0
  %362 = vmatpush.xpose.msra.mxu0 %v345
  %363 = vmatmul.f32.gmra.mxu0 %v343
  %v364 = vpop.f32.mrf.mxu0
  %v365 = vadd.f32 0.0, %v364
  %366 = vdwg.mxu0
  %367 = vrot.lane.b32.xlu0 %v172, 120
  %v368 = vpop.permute.xlu0 %367
  %369 = vrot.lane.b32.xlu0 %v172, 88
  %v370 = vpop.permute.xlu0 %369
  %v371 = vsel %vm177, %v368, 0
  %v373 = vsel %vm177, %v370, 0
  %375 = vmatpush.xpose.msra.mxu0 0.0
  %376 = vmatpush.xpose.msra.mxu0 0.0
  %377 = vmatpush.xpose.msra.mxu0 0.0
  %378 = vmatpush.xpose.msra.mxu0 0.0
  %379 = vmatpush.xpose.msra.mxu0 0.0
  %380 = vmatpush.xpose.msra.mxu0 0.0
  %381 = vmatpush.xpose.msra.mxu0 0.0
  %382 = vmatpush.xpose.msra.mxu0 0.0
  %383 = vmatpush.xpose.msra.mxu0 0.0
  %384 = vmatpush.xpose.msra.mxu0 0.0
  %385 = vmatpush.xpose.msra.mxu0 0.0
  %386 = vmatpush.xpose.msra.mxu0 0.0
  %387 = vmatpush.xpose.msra.mxu0 0.0
  %388 = vmatpush.xpose.msra.mxu0 0.0
  %389 = vmatpush.xpose.msra.mxu0 0.0
  %390 = vmatpush.xpose.msra.mxu0 %v373
  %391 = vmatmul.f32.gmra.mxu0 %v371
  %v392 = vpop.f32.mrf.mxu0
  %v393 = vadd.f32 0.0, %v392
  %394 = vdwg.mxu0
  %v395 = vmul.f32 %v365, 0.35355338
  %v396 = vmul.f32 %v393, 0.35355338
  %v397 = vadd.f32 %v395, %v115
  %v398 = vadd.f32 %v396, %v115
  %v399 = vsel %vm177, %v397, -inf
  %400 = vmax.xlane.f32.xlu0 %v399
  %v401 = vpop.xlane.xlu0 %400
  %v402 = vsel %vm177, %v398, -inf
  %403 = vmax.xlane.f32.xlu0 %v402
  %v404 = vpop.xlane.xlu0 %403
  %v405 = vsub.f32 %v397, %v401
  %v406 = vsub.f32 %v398, %v404
  %v407 = vmul.f32 %v405, 1.442695
  %v408 = vpow.pop %v407
  %v409 = vmul.f32 %v406, 1.442695
  %v410 = vpow.pop %v409
  %v411 = vsel %vm177, %v408, 0.0
  %412 = vadd.xlane.f32.xlu0 %v411
  %v413 = vpop.xlane.xlu0 %412
  %v414 = vsel %vm177, %v410, 0.0
  %415 = vadd.xlane.f32.xlu0 %v414
  %v416 = vpop.xlane.xlu0 %415
  %v417 = vrcp.pop %v413
  %v418 = vrcp.pop %v416
  %v419 = vmul.f32 %v408, %v417
  %v420 = vmul.f32 %v410, %v418
  %421 = vrot.lane.b32.xlu0 %v169, 56
  %v422 = vpop.permute.xlu0 %421
  %v425 = vsel %vm177, %v419, 0
  %427 = vmatpush.msra.mxu0 0.0
  %428 = vmatpush.msra.mxu0 0.0
  %429 = vmatpush.msra.mxu0 0.0
  %430 = vmatpush.msra.mxu0 0.0
  %431 = vmatpush.msra.mxu0 0.0
  %432 = vmatpush.msra.mxu0 0.0
  %433 = vmatpush.msra.mxu0 0.0
  %434 = vmatpush.msra.mxu0 0.0
  %435 = vmatpush.msra.mxu0 0.0
  %436 = vmatpush.msra.mxu0 0.0
  %437 = vmatpush.msra.mxu0 0.0
  %438 = vmatpush.msra.mxu0 0.0
  %439 = vmatpush.msra.mxu0 0.0
  %440 = vmatpush.msra.mxu0 0.0
  %441 = vmatpush.msra.mxu0 0.0
  %442 = vmatpush.msra.mxu0 %v422
  %443 = vmatmul.f32.gmra.mxu0 %v425
  %v444 = vpop.f32.mrf.mxu0
  %v445 = vadd.f32 0.0, %v444
  %446 = vdwg.mxu0
  %447 = vrot.lane.b32.xlu0 %v172, 56
  %v448 = vpop.permute.xlu0 %447
  %v451 = vsel %vm177, %v420, 0
  %453 = vmatpush.msra.mxu0 0.0
  %454 = vmatpush.msra.mxu0 0.0
  %455 = vmatpush.msra.mxu0 0.0
  %456 = vmatpush.msra.mxu0 0.0
  %457 = vmatpush.msra.mxu0 0.0
  %458 = vmatpush.msra.mxu0 0.0
  %459 = vmatpush.msra.mxu0 0.0
  %460 = vmatpush.msra.mxu0 0.0
  %461 = vmatpush.msra.mxu0 0.0
  %462 = vmatpush.msra.mxu0 0.0
  %463 = vmatpush.msra.mxu0 0.0
  %464 = vmatpush.msra.mxu0 0.0
  %465 = vmatpush.msra.mxu0 0.0
  %466 = vmatpush.msra.mxu0 0.0
  %467 = vmatpush.msra.mxu0 0.0
  %468 = vmatpush.msra.mxu0 %v448
  %469 = vmatmul.f32.gmra.mxu0 %v451
  %v470 = vpop.f32.mrf.mxu0
  %v471 = vadd.f32 0.0, %v470
  %472 = vdwg.mxu0
  %v474 = vsel %vm177, %v445, 0
  %v477 = vsel %vm177, %v471, 0
  %479 = vmatpush.msra.mxu0 0.0
  %480 = vmatpush.msra.mxu0 0.0
  %481 = vmatpush.msra.mxu0 0.0
  %482 = vmatpush.msra.mxu0 0.0
  %483 = vmatpush.msra.mxu0 0.0
  %484 = vmatpush.msra.mxu0 0.0
  %485 = vmatpush.msra.mxu0 0.0
  %486 = vmatpush.msra.mxu0 0.0
  %487 = vmatpush.msra.mxu0 0.0
  %488 = vmatpush.msra.mxu0 0.0
  %489 = vmatpush.msra.mxu0 0.0
  %490 = vmatpush.msra.mxu0 0.0
  %491 = vmatpush.msra.mxu0 0.0
  %492 = vmatpush.msra.mxu0 0.0
  %493 = vmatpush.msra.mxu0 0.0
  %494 = vmatpush.msra.mxu0 %v121
  %495 = vmatmul.f32.gmra.mxu0 %v474
  %v496 = vpop.f32.mrf.mxu0
  %v497 = vadd.f32 0.0, %v496
  %498 = vmatmul.f32.gmra.mxu0 %v477
  %v499 = vpop.f32.mrf.mxu0
  %v500 = vadd.f32 0.0, %v499
  %501 = vdwg.mxu0
  %v502 = vadd.f32 %v337, %v497
  %v503 = vadd.f32 %v338, %v500
  %504 = vrot.lane.b32.xlu0 %v169, 112
  %v505 = vpop.permute.xlu0 %504
  %506 = vrot.lane.b32.xlu0 %v169, 80
  %v507 = vpop.permute.xlu0 %506
  %v508 = vsel %vm177, %v505, 0
  %v510 = vsel %vm177, %v507, 0
  %512 = vmatpush.xpose.msra.mxu0 0.0
  %513 = vmatpush.xpose.msra.mxu0 0.0
  %514 = vmatpush.xpose.msra.mxu0 0.0
  %515 = vmatpush.xpose.msra.mxu0 0.0
  %516 = vmatpush.xpose.msra.mxu0 0.0
  %517 = vmatpush.xpose.msra.mxu0 0.0
  %518 = vmatpush.xpose.msra.mxu0 0.0
  %519 = vmatpush.xpose.msra.mxu0 0.0
  %520 = vmatpush.xpose.msra.mxu0 0.0
  %521 = vmatpush.xpose.msra.mxu0 0.0
  %522 = vmatpush.xpose.msra.mxu0 0.0
  %523 = vmatpush.xpose.msra.mxu0 0.0
  %524 = vmatpush.xpose.msra.mxu0 0.0
  %525 = vmatpush.xpose.msra.mxu0 0.0
  %526 = vmatpush.xpose.msra.mxu0 0.0
  %527 = vmatpush.xpose.msra.mxu0 %v510
  %528 = vmatmul.f32.gmra.mxu0 %v508
  %v529 = vpop.f32.mrf.mxu0
  %v530 = vadd.f32 0.0, %v529
  %531 = vdwg.mxu0
  %532 = vrot.lane.b32.xlu0 %v172, 112
  %v533 = vpop.permute.xlu0 %532
  %534 = vrot.lane.b32.xlu0 %v172, 80
  %v535 = vpop.permute.xlu0 %534
  %v536 = vsel %vm177, %v533, 0
  %v538 = vsel %vm177, %v535, 0
  %540 = vmatpush.xpose.msra.mxu0 0.0
  %541 = vmatpush.xpose.msra.mxu0 0.0
  %542 = vmatpush.xpose.msra.mxu0 0.0
  %543 = vmatpush.xpose.msra.mxu0 0.0
  %544 = vmatpush.xpose.msra.mxu0 0.0
  %545 = vmatpush.xpose.msra.mxu0 0.0
  %546 = vmatpush.xpose.msra.mxu0 0.0
  %547 = vmatpush.xpose.msra.mxu0 0.0
  %548 = vmatpush.xpose.msra.mxu0 0.0
  %549 = vmatpush.xpose.msra.mxu0 0.0
  %550 = vmatpush.xpose.msra.mxu0 0.0
  %551 = vmatpush.xpose.msra.mxu0 0.0
  %552 = vmatpush.xpose.msra.mxu0 0.0
  %553 = vmatpush.xpose.msra.mxu0 0.0
  %554 = vmatpush.xpose.msra.mxu0 0.0
  %555 = vmatpush.xpose.msra.mxu0 %v538
  %556 = vmatmul.f32.gmra.mxu0 %v536
  %v557 = vpop.f32.mrf.mxu0
  %v558 = vadd.f32 0.0, %v557
  %559 = vdwg.mxu0
  %v560 = vmul.f32 %v530, 0.35355338
  %v561 = vmul.f32 %v558, 0.35355338
  %v562 = vadd.f32 %v560, %v115
  %v563 = vadd.f32 %v561, %v115
  %v564 = vsel %vm177, %v562, -inf
  %565 = vmax.xlane.f32.xlu0 %v564
  %v566 = vpop.xlane.xlu0 %565
  %v567 = vsel %vm177, %v563, -inf
  %568 = vmax.xlane.f32.xlu0 %v567
  %v569 = vpop.xlane.xlu0 %568
  %v570 = vsub.f32 %v562, %v566
  %v571 = vsub.f32 %v563, %v569
  %v572 = vmul.f32 %v570, 1.442695
  %v573 = vpow.pop %v572
  %v574 = vmul.f32 %v571, 1.442695
  %v575 = vpow.pop %v574
  %v576 = vsel %vm177, %v573, 0.0
  %577 = vadd.xlane.f32.xlu0 %v576
  %v578 = vpop.xlane.xlu0 %577
  %v579 = vsel %vm177, %v575, 0.0
  %580 = vadd.xlane.f32.xlu0 %v579
  %v581 = vpop.xlane.xlu0 %580
  %v582 = vrcp.pop %v578
  %v583 = vrcp.pop %v581
  %v584 = vmul.f32 %v573, %v582
  %v585 = vmul.f32 %v575, %v583
  %586 = vrot.lane.b32.xlu0 %v169, 48
  %v587 = vpop.permute.xlu0 %586
  %v590 = vsel %vm177, %v584, 0
  %592 = vmatpush.msra.mxu0 0.0
  %593 = vmatpush.msra.mxu0 0.0
  %594 = vmatpush.msra.mxu0 0.0
  %595 = vmatpush.msra.mxu0 0.0
  %596 = vmatpush.msra.mxu0 0.0
  %597 = vmatpush.msra.mxu0 0.0
  %598 = vmatpush.msra.mxu0 0.0
  %599 = vmatpush.msra.mxu0 0.0
  %600 = vmatpush.msra.mxu0 0.0
  %601 = vmatpush.msra.mxu0 0.0
  %602 = vmatpush.msra.mxu0 0.0
  %603 = vmatpush.msra.mxu0 0.0
  %604 = vmatpush.msra.mxu0 0.0
  %605 = vmatpush.msra.mxu0 0.0
  %606 = vmatpush.msra.mxu0 0.0
  %607 = vmatpush.msra.mxu0 %v587
  %608 = vmatmul.f32.gmra.mxu0 %v590
  %v609 = vpop.f32.mrf.mxu0
  %v610 = vadd.f32 0.0, %v609
  %611 = vdwg.mxu0
  %612 = vrot.lane.b32.xlu0 %v172, 48
  %v613 = vpop.permute.xlu0 %612
  %v616 = vsel %vm177, %v585, 0
  %618 = vmatpush.msra.mxu0 0.0
  %619 = vmatpush.msra.mxu0 0.0
  %620 = vmatpush.msra.mxu0 0.0
  %621 = vmatpush.msra.mxu0 0.0
  %622 = vmatpush.msra.mxu0 0.0
  %623 = vmatpush.msra.mxu0 0.0
  %624 = vmatpush.msra.mxu0 0.0
  %625 = vmatpush.msra.mxu0 0.0
  %626 = vmatpush.msra.mxu0 0.0
  %627 = vmatpush.msra.mxu0 0.0
  %628 = vmatpush.msra.mxu0 0.0
  %629 = vmatpush.msra.mxu0 0.0
  %630 = vmatpush.msra.mxu0 0.0
  %631 = vmatpush.msra.mxu0 0.0
  %632 = vmatpush.msra.mxu0 0.0
  %633 = vmatpush.msra.mxu0 %v613
  %634 = vmatmul.f32.gmra.mxu0 %v616
  %v635 = vpop.f32.mrf.mxu0
  %v636 = vadd.f32 0.0, %v635
  %637 = vdwg.mxu0
  %v639 = vsel %vm177, %v610, 0
  %v642 = vsel %vm177, %v636, 0
  %644 = vmatpush.msra.mxu0 0.0
  %645 = vmatpush.msra.mxu0 0.0
  %646 = vmatpush.msra.mxu0 0.0
  %647 = vmatpush.msra.mxu0 0.0
  %648 = vmatpush.msra.mxu0 0.0
  %649 = vmatpush.msra.mxu0 0.0
  %650 = vmatpush.msra.mxu0 0.0
  %651 = vmatpush.msra.mxu0 0.0
  %652 = vmatpush.msra.mxu0 0.0
  %653 = vmatpush.msra.mxu0 0.0
  %654 = vmatpush.msra.mxu0 0.0
  %655 = vmatpush.msra.mxu0 0.0
  %656 = vmatpush.msra.mxu0 0.0
  %657 = vmatpush.msra.mxu0 0.0
  %658 = vmatpush.msra.mxu0 0.0
  %659 = vmatpush.msra.mxu0 %v122
  %660 = vmatmul.f32.gmra.mxu0 %v639
  %v661 = vpop.f32.mrf.mxu0
  %v662 = vadd.f32 0.0, %v661
  %663 = vmatmul.f32.gmra.mxu0 %v642
  %v664 = vpop.f32.mrf.mxu0
  %v665 = vadd.f32 0.0, %v664
  %666 = vdwg.mxu0
  %v667 = vadd.f32 %v502, %v662
  %v668 = vadd.f32 %v503, %v665
  %669 = vrot.lane.b32.xlu0 %v169, 104
  %v670 = vpop.permute.xlu0 %669
  %671 = vrot.lane.b32.xlu0 %v169, 72
  %v672 = vpop.permute.xlu0 %671
  %v673 = vsel %vm177, %v670, 0
  %v675 = vsel %vm177, %v672, 0
  %677 = vmatpush.xpose.msra.mxu0 0.0
  %678 = vmatpush.xpose.msra.mxu0 0.0
  %679 = vmatpush.xpose.msra.mxu0 0.0
  %680 = vmatpush.xpose.msra.mxu0 0.0
  %681 = vmatpush.xpose.msra.mxu0 0.0
  %682 = vmatpush.xpose.msra.mxu0 0.0
  %683 = vmatpush.xpose.msra.mxu0 0.0
  %684 = vmatpush.xpose.msra.mxu0 0.0
  %685 = vmatpush.xpose.msra.mxu0 0.0
  %686 = vmatpush.xpose.msra.mxu0 0.0
  %687 = vmatpush.xpose.msra.mxu0 0.0
  %688 = vmatpush.xpose.msra.mxu0 0.0
  %689 = vmatpush.xpose.msra.mxu0 0.0
  %690 = vmatpush.xpose.msra.mxu0 0.0
  %691 = vmatpush.xpose.msra.mxu0 0.0
  %692 = vmatpush.xpose.msra.mxu0 %v675
  %693 = vmatmul.f32.gmra.mxu0 %v673
  %v694 = vpop.f32.mrf.mxu0
  %v695 = vadd.f32 0.0, %v694
  %696 = vdwg.mxu0
  %697 = vrot.lane.b32.xlu0 %v172, 104
  %v698 = vpop.permute.xlu0 %697
  %699 = vrot.lane.b32.xlu0 %v172, 72
  %v700 = vpop.permute.xlu0 %699
  %v701 = vsel %vm177, %v698, 0
  %v703 = vsel %vm177, %v700, 0
  %705 = vmatpush.xpose.msra.mxu0 0.0
  %706 = vmatpush.xpose.msra.mxu0 0.0
  %707 = vmatpush.xpose.msra.mxu0 0.0
  %708 = vmatpush.xpose.msra.mxu0 0.0
  %709 = vmatpush.xpose.msra.mxu0 0.0
  %710 = vmatpush.xpose.msra.mxu0 0.0
  %711 = vmatpush.xpose.msra.mxu0 0.0
  %712 = vmatpush.xpose.msra.mxu0 0.0
  %713 = vmatpush.xpose.msra.mxu0 0.0
  %714 = vmatpush.xpose.msra.mxu0 0.0
  %715 = vmatpush.xpose.msra.mxu0 0.0
  %716 = vmatpush.xpose.msra.mxu0 0.0
  %717 = vmatpush.xpose.msra.mxu0 0.0
  %718 = vmatpush.xpose.msra.mxu0 0.0
  %719 = vmatpush.xpose.msra.mxu0 0.0
  %720 = vmatpush.xpose.msra.mxu0 %v703
  %721 = vmatmul.f32.gmra.mxu0 %v701
  %v722 = vpop.f32.mrf.mxu0
  %v723 = vadd.f32 0.0, %v722
  %724 = vdwg.mxu0
  %v725 = vmul.f32 %v695, 0.35355338
  %v726 = vmul.f32 %v723, 0.35355338
  %v727 = vadd.f32 %v725, %v115
  %v728 = vadd.f32 %v726, %v115
  %v729 = vsel %vm177, %v727, -inf
  %730 = vmax.xlane.f32.xlu0 %v729
  %v731 = vpop.xlane.xlu0 %730
  %v732 = vsel %vm177, %v728, -inf
  %733 = vmax.xlane.f32.xlu0 %v732
  %v734 = vpop.xlane.xlu0 %733
  %v735 = vsub.f32 %v727, %v731
  %v736 = vsub.f32 %v728, %v734
  %v737 = vmul.f32 %v735, 1.442695
  %v738 = vpow.pop %v737
  %v739 = vmul.f32 %v736, 1.442695
  %v740 = vpow.pop %v739
  %v741 = vsel %vm177, %v738, 0.0
  %742 = vadd.xlane.f32.xlu0 %v741
  %v743 = vpop.xlane.xlu0 %742
  %v744 = vsel %vm177, %v740, 0.0
  %745 = vadd.xlane.f32.xlu0 %v744
  %v746 = vpop.xlane.xlu0 %745
  %v747 = vrcp.pop %v743
  %v748 = vrcp.pop %v746
  %v749 = vmul.f32 %v738, %v747
  %v750 = vmul.f32 %v740, %v748
  %751 = vrot.lane.b32.xlu0 %v169, 40
  %v752 = vpop.permute.xlu0 %751
  %v755 = vsel %vm177, %v749, 0
  %757 = vmatpush.msra.mxu0 0.0
  %758 = vmatpush.msra.mxu0 0.0
  %759 = vmatpush.msra.mxu0 0.0
  %760 = vmatpush.msra.mxu0 0.0
  %761 = vmatpush.msra.mxu0 0.0
  %762 = vmatpush.msra.mxu0 0.0
  %763 = vmatpush.msra.mxu0 0.0
  %764 = vmatpush.msra.mxu0 0.0
  %765 = vmatpush.msra.mxu0 0.0
  %766 = vmatpush.msra.mxu0 0.0
  %767 = vmatpush.msra.mxu0 0.0
  %768 = vmatpush.msra.mxu0 0.0
  %769 = vmatpush.msra.mxu0 0.0
  %770 = vmatpush.msra.mxu0 0.0
  %771 = vmatpush.msra.mxu0 0.0
  %772 = vmatpush.msra.mxu0 %v752
  %773 = vmatmul.f32.gmra.mxu0 %v755
  %v774 = vpop.f32.mrf.mxu0
  %v775 = vadd.f32 0.0, %v774
  %776 = vdwg.mxu0
  %777 = vrot.lane.b32.xlu0 %v172, 40
  %v778 = vpop.permute.xlu0 %777
  %v781 = vsel %vm177, %v750, 0
  %783 = vmatpush.msra.mxu0 0.0
  %784 = vmatpush.msra.mxu0 0.0
  %785 = vmatpush.msra.mxu0 0.0
  %786 = vmatpush.msra.mxu0 0.0
  %787 = vmatpush.msra.mxu0 0.0
  %788 = vmatpush.msra.mxu0 0.0
  %789 = vmatpush.msra.mxu0 0.0
  %790 = vmatpush.msra.mxu0 0.0
  %791 = vmatpush.msra.mxu0 0.0
  %792 = vmatpush.msra.mxu0 0.0
  %793 = vmatpush.msra.mxu0 0.0
  %794 = vmatpush.msra.mxu0 0.0
  %795 = vmatpush.msra.mxu0 0.0
  %796 = vmatpush.msra.mxu0 0.0
  %797 = vmatpush.msra.mxu0 0.0
  %798 = vmatpush.msra.mxu0 %v778
  %799 = vmatmul.f32.gmra.mxu0 %v781
  %v800 = vpop.f32.mrf.mxu0
  %v801 = vadd.f32 0.0, %v800
  %802 = vdwg.mxu0
  %v804 = vsel %vm177, %v775, 0
  %v807 = vsel %vm177, %v801, 0
  %809 = vmatpush.msra.mxu0 0.0
  %810 = vmatpush.msra.mxu0 0.0
  %811 = vmatpush.msra.mxu0 0.0
  %812 = vmatpush.msra.mxu0 0.0
  %813 = vmatpush.msra.mxu0 0.0
  %814 = vmatpush.msra.mxu0 0.0
  %815 = vmatpush.msra.mxu0 0.0
  %816 = vmatpush.msra.mxu0 0.0
  %817 = vmatpush.msra.mxu0 0.0
  %818 = vmatpush.msra.mxu0 0.0
  %819 = vmatpush.msra.mxu0 0.0
  %820 = vmatpush.msra.mxu0 0.0
  %821 = vmatpush.msra.mxu0 0.0
  %822 = vmatpush.msra.mxu0 0.0
  %823 = vmatpush.msra.mxu0 0.0
  %824 = vmatpush.msra.mxu0 %v123
  %825 = vmatmul.f32.gmra.mxu0 %v804
  %v826 = vpop.f32.mrf.mxu0
  %v827 = vadd.f32 0.0, %v826
  %828 = vmatmul.f32.gmra.mxu0 %v807
  %v829 = vpop.f32.mrf.mxu0
  %v830 = vadd.f32 0.0, %v829
  %831 = vdwg.mxu0
  %v832 = vadd.f32 %v667, %v827
  %v833 = vadd.f32 %v668, %v830
  %v834 = vadd.f32 %v108, %v832
  %v835 = vadd.f32 %v109, %v833
  %v836 = vsel %vm52, %v834, 0.0
  %837 = vadd.xlane.f32.xlu0 %v836
  %v838 = vpop.xlane.xlu0 %837
  %v839 = vsel %vm52, %v835, 0.0
  %840 = vadd.xlane.f32.xlu0 %v839
  %v841 = vpop.xlane.xlu0 %840
  %v842 = vmul.f32 %v838, %v65
  %v843 = vmul.f32 %v841, %v65
  %v844 = vsub.f32 %v834, %v842
  %v845 = vsub.f32 %v835, %v843
  %v846 = vmul.f32 %v844, %v844
  %v847 = vmul.f32 %v845, %v845
  %v848 = vsel %vm52, %v846, 0.0
  %849 = vadd.xlane.f32.xlu0 %v848
  %v850 = vpop.xlane.xlu0 %849
  %v851 = vsel %vm52, %v847, 0.0
  %852 = vadd.xlane.f32.xlu0 %v851
  %v853 = vpop.xlane.xlu0 %852
  %v854 = vmul.f32 %v850, %v65
  %v855 = vmul.f32 %v853, %v65
  %v856 = vadd.f32 %v854, 1e-05
  %v857 = vadd.f32 %v855, 1e-05
  %v858 = vrsqrt.pop %v856
  %v859 = vmul.f32 %v858, %v856
  %v860 = vmul.f32 %v859, %v858
  %v861 = vmul.f32 0.5, %v860
  %v862 = vsub.f32 1.5, %v861
  %v863 = vmul.f32 %v858, %v862
  %vm864 = vweird.f32 %v856
  %vm865 = vweird.f32 %v858
  %vm866 = vmor %vm864, %vm865
  %v867 = vsel %vm866, %v858, %v863
  %v868 = vrsqrt.pop %v857
  %v869 = vmul.f32 %v868, %v857
  %v870 = vmul.f32 %v869, %v868
  %v871 = vmul.f32 0.5, %v870
  %v872 = vsub.f32 1.5, %v871
  %v873 = vmul.f32 %v868, %v872
  %vm874 = vweird.f32 %v857
  %vm875 = vweird.f32 %v868
  %vm876 = vmor %vm874, %vm875
  %v877 = vsel %vm876, %v868, %v873
  %v878 = vmul.f32 %v844, %v867
  %v879 = vmul.f32 %v845, %v877
  %v880 = vperm.slane %v138, 0
  %v881 = vmul.f32 %v878, %v880
  %v882 = vmul.f32 %v879, %v880
  %v883 = vperm.slane %v139, 0
  %v884 = vadd.f32 %v881, %v883
  %v885 = vadd.f32 %v882, %v883
  %v886 = vperm.slane %v142, 0
  %v888 = vsel %vm52, %v884, 0
  %v891 = vsel %vm52, %v885, 0
  %893 = vmatpush.msra.mxu0 0.0
  %894 = vmatpush.msra.mxu0 0.0
  %895 = vmatpush.msra.mxu0 0.0
  %896 = vmatpush.msra.mxu0 0.0
  %897 = vmatpush.msra.mxu0 0.0
  %898 = vmatpush.msra.mxu0 0.0
  %899 = vmatpush.msra.mxu0 0.0
  %900 = vmatpush.msra.mxu0 0.0
  %901 = vmatpush.msra.mxu0 0.0
  %902 = vmatpush.msra.mxu0 0.0
  %903 = vmatpush.msra.mxu0 0.0
  %904 = vmatpush.msra.mxu0 0.0
  %905 = vmatpush.msra.mxu0 %v127
  %906 = vmatpush.msra.mxu0 %v126
  %907 = vmatpush.msra.mxu0 %v125
  %908 = vmatpush.msra.mxu0 %v124
  %909 = vmatmul.f32.gmra.mxu0 %v888
  %v910 = vpop.f32.mrf.mxu0
  %v911 = vadd.f32 %v886, %v910
  %912 = vmatmul.f32.gmra.mxu0 %v891
  %v913 = vpop.f32.mrf.mxu0
  %v914 = vadd.f32 %v886, %v913
  %915 = vdwg.mxu0
  %v916 = vmax.f32 %v911, 0.0
  %v917 = vmax.f32 %v914, 0.0
  %v918 = vperm.slane %v143, 0
  %vm919 = vcmask 523264
  %v921 = vsel %vm919, %v916, 0
  %v924 = vsel %vm919, %v917, 0
  %926 = vmatpush.msra.mxu0 0.0
  %927 = vmatpush.msra.mxu0 0.0
  %928 = vmatpush.msra.mxu0 0.0
  %929 = vmatpush.msra.mxu0 0.0
  %930 = vmatpush.msra.mxu0 0.0
  %931 = vmatpush.msra.mxu0 0.0
  %932 = vmatpush.msra.mxu0 0.0
  %933 = vmatpush.msra.mxu0 0.0
  %934 = vmatpush.msra.mxu0 %v135
  %935 = vmatpush.msra.mxu0 %v134
  %936 = vmatpush.msra.mxu0 %v133
  %937 = vmatpush.msra.mxu0 %v132
  %938 = vmatpush.msra.mxu0 %v131
  %939 = vmatpush.msra.mxu0 %v130
  %940 = vmatpush.msra.mxu0 %v129
  %941 = vmatpush.msra.mxu0 %v128
  %942 = vmatmul.f32.gmra.mxu0 %v921
  %v943 = vpop.f32.mrf.mxu0
  %v944 = vadd.f32 %v918, %v943
  %945 = vmatmul.f32.gmra.mxu0 %v924
  %v946 = vpop.f32.mrf.mxu0
  %v947 = vadd.f32 %v918, %v946
  %948 = vdwg.mxu0
  %v949 = vadd.f32 %v884, %v944
  %v950 = vadd.f32 %v885, %v947
  %v951 = vsel %vm52, %v949, 0.0
  %952 = vadd.xlane.f32.xlu0 %v951
  %v953 = vpop.xlane.xlu0 %952
  %v954 = vsel %vm52, %v950, 0.0
  %955 = vadd.xlane.f32.xlu0 %v954
  %v956 = vpop.xlane.xlu0 %955
  %v957 = vmul.f32 %v953, %v65
  %v958 = vmul.f32 %v956, %v65
  %v959 = vsub.f32 %v949, %v957
  %v960 = vsub.f32 %v950, %v958
  %v961 = vmul.f32 %v959, %v959
  %v962 = vmul.f32 %v960, %v960
  %v963 = vsel %vm52, %v961, 0.0
  %964 = vadd.xlane.f32.xlu0 %v963
  %v965 = vpop.xlane.xlu0 %964
  %v966 = vsel %vm52, %v962, 0.0
  %967 = vadd.xlane.f32.xlu0 %v966
  %v968 = vpop.xlane.xlu0 %967
  %v969 = vmul.f32 %v965, %v65
  %v970 = vmul.f32 %v968, %v65
  %v971 = vadd.f32 %v969, 1e-05
  %v972 = vadd.f32 %v970, 1e-05
  %v973 = vrsqrt.pop %v971
  %v974 = vmul.f32 %v973, %v971
  %v975 = vmul.f32 %v974, %v973
  %v976 = vmul.f32 0.5, %v975
  %v977 = vsub.f32 1.5, %v976
  %v978 = vmul.f32 %v973, %v977
  %vm979 = vweird.f32 %v971
  %vm980 = vweird.f32 %v973
  %vm981 = vmor %vm979, %vm980
  %v982 = vsel %vm981, %v973, %v978
  %v983 = vrsqrt.pop %v972
  %v984 = vmul.f32 %v983, %v972
  %v985 = vmul.f32 %v984, %v983
  %v986 = vmul.f32 0.5, %v985
  %v987 = vsub.f32 1.5, %v986
  %v988 = vmul.f32 %v983, %v987
  %vm989 = vweird.f32 %v972
  %vm990 = vweird.f32 %v983
  %vm991 = vmor %vm989, %vm990
  %v992 = vsel %vm991, %v983, %v988
  %v993 = vmul.f32 %v959, %v982
  %v994 = vmul.f32 %v960, %v992
  %v995 = vperm.slane %v140, 0
  %v996 = vmul.f32 %v993, %v995
  %v997 = vmul.f32 %v994, %v995
  %v998 = vperm.slane %v141, 0
  %v999 = vadd.f32 %v996, %v998
  %v1000 = vadd.f32 %v997, %v998
  %v1001 = vld [vmem:[%s1 + $0xb0] sm:$0xff]
  %v1002 = vld [vmem:[%s1 + $0xb8] sm:$0xff]
  %v1003 = vld [vmem:[%s1 + $0xc0] sm:$0xff]
  %v1004 = vld [vmem:[%s1 + $0xc8] sm:$0xff]
  %v1005 = vld [vmem:[%s1 + $0xd0] sm:$0xff]
  %v1006 = vld [vmem:[%s1 + $0xd8] sm:$0xff]
  %v1007 = vld [vmem:[%s1 + $0xe0] sm:$0xff]
  %v1008 = vld [vmem:[%s1 + $0xe8] sm:$0xff]
  %v1009 = vld [vmem:[%s1 + $0xf0] sm:$0xff]
  %v1010 = vld [vmem:[%s1 + $0xf8] sm:$0xff]
  %v1011 = vld [vmem:[%s1 + $0x100] sm:$0xff]
  %v1012 = vld [vmem:[%s1 + $0x108] sm:$0xff]
  %v1013 = vld [vmem:[%s1 + $0x110] sm:$0xff]
  %v1014 = vld [vmem:[%s1 + $0x118] sm:$0xff]
  %v1015 = vld [vmem:[%s1 + $0x120] sm:$0xff]
  %v1016 = vld [vmem:[%s1 + $0x128] sm:$0xff]
  %v1017 = vld [vmem:[%s1 + $0x130] sm:$0xff]
  %v1018 = vld [vmem:[%s1 + $0x138] sm:$0xff]
  %v1019 = vld [vmem:[%s1 + $0x140] sm:$0xff]
  %v1020 = vld [vmem:[%s1 + $0x148] sm:$0xff]
  %v1021 = vld [vmem:[%s2 + $0xb] sm:$0x1]
  %v1022 = vld [vmem:[%s2 + $0xc] sm:$0x1]
  %v1023 = vld [vmem:[%s2 + $0xd] sm:$0x1]
  %v1024 = vld [vmem:[%s2 + $0xe] sm:$0x1]
  %v1025 = vld [vmem:[%s2 + $0xf] sm:$0x1]
  %v1026 = vld [vmem:[%s2 + $0x10] sm:$0x1]
  %v1027 = vld [vmem:[%s2 + $0x11] sm:$0x1]
  %v1028 = vld [vmem:[%s2 + $0x12] sm:$0x1]
  %v1029 = vperm.slane %v1021, 0
  %v1031 = vsel %vm52, %v999, 0
  %v1034 = vsel %vm52, %v1000, 0
  %1036 = vmatpush.msra.mxu0 0.0
  %1037 = vmatpush.msra.mxu0 0.0
  %1038 = vmatpush.msra.mxu0 0.0
  %1039 = vmatpush.msra.mxu0 0.0
  %1040 = vmatpush.msra.mxu0 0.0
  %1041 = vmatpush.msra.mxu0 0.0
  %1042 = vmatpush.msra.mxu0 0.0
  %1043 = vmatpush.msra.mxu0 0.0
  %1044 = vmatpush.msra.mxu0 0.0
  %1045 = vmatpush.msra.mxu0 0.0
  %1046 = vmatpush.msra.mxu0 0.0
  %1047 = vmatpush.msra.mxu0 0.0
  %1048 = vmatpush.msra.mxu0 %v1004
  %1049 = vmatpush.msra.mxu0 %v1003
  %1050 = vmatpush.msra.mxu0 %v1002
  %1051 = vmatpush.msra.mxu0 %v1001
  %1052 = vmatmul.f32.gmra.mxu0 %v1031
  %v1053 = vpop.f32.mrf.mxu0
  %v1054 = vadd.f32 %v1029, %v1053
  %1055 = vmatmul.f32.gmra.mxu0 %v1034
  %v1056 = vpop.f32.mrf.mxu0
  %v1057 = vadd.f32 %v1029, %v1056
  %1058 = vdwg.mxu0
  %1060 = vrot.lane.b32.xlu0 %v1054, 96
  %v1061 = vpop.permute.xlu0 %1060
  %v1062 = vsel %vm177, %v1054, 0
  %v1064 = vsel %vm177, %v1061, 0
  %1066 = vmatpush.xpose.msra.mxu0 0.0
  %1067 = vmatpush.xpose.msra.mxu0 0.0
  %1068 = vmatpush.xpose.msra.mxu0 0.0
  %1069 = vmatpush.xpose.msra.mxu0 0.0
  %1070 = vmatpush.xpose.msra.mxu0 0.0
  %1071 = vmatpush.xpose.msra.mxu0 0.0
  %1072 = vmatpush.xpose.msra.mxu0 0.0
  %1073 = vmatpush.xpose.msra.mxu0 0.0
  %1074 = vmatpush.xpose.msra.mxu0 0.0
  %1075 = vmatpush.xpose.msra.mxu0 0.0
  %1076 = vmatpush.xpose.msra.mxu0 0.0
  %1077 = vmatpush.xpose.msra.mxu0 0.0
  %1078 = vmatpush.xpose.msra.mxu0 0.0
  %1079 = vmatpush.xpose.msra.mxu0 0.0
  %1080 = vmatpush.xpose.msra.mxu0 0.0
  %1081 = vmatpush.xpose.msra.mxu0 %v1064
  %1082 = vmatmul.f32.gmra.mxu0 %v1062
  %v1083 = vpop.f32.mrf.mxu0
  %v1084 = vadd.f32 0.0, %v1083
  %1085 = vdwg.mxu0
  %1087 = vrot.lane.b32.xlu0 %v1057, 96
  %v1088 = vpop.permute.xlu0 %1087
  %v1089 = vsel %vm177, %v1057, 0
  %v1091 = vsel %vm177, %v1088, 0
  %1093 = vmatpush.xpose.msra.mxu0 0.0
  %1094 = vmatpush.xpose.msra.mxu0 0.0
  %1095 = vmatpush.xpose.msra.mxu0 0.0
  %1096 = vmatpush.xpose.msra.mxu0 0.0
  %1097 = vmatpush.xpose.msra.mxu0 0.0
  %1098 = vmatpush.xpose.msra.mxu0 0.0
  %1099 = vmatpush.xpose.msra.mxu0 0.0
  %1100 = vmatpush.xpose.msra.mxu0 0.0
  %1101 = vmatpush.xpose.msra.mxu0 0.0
  %1102 = vmatpush.xpose.msra.mxu0 0.0
  %1103 = vmatpush.xpose.msra.mxu0 0.0
  %1104 = vmatpush.xpose.msra.mxu0 0.0
  %1105 = vmatpush.xpose.msra.mxu0 0.0
  %1106 = vmatpush.xpose.msra.mxu0 0.0
  %1107 = vmatpush.xpose.msra.mxu0 0.0
  %1108 = vmatpush.xpose.msra.mxu0 %v1091
  %1109 = vmatmul.f32.gmra.mxu0 %v1089
  %v1110 = vpop.f32.mrf.mxu0
  %v1111 = vadd.f32 0.0, %v1110
  %1112 = vdwg.mxu0
  %v1113 = vmul.f32 %v1084, 0.35355338
  %v1114 = vmul.f32 %v1111, 0.35355338
  %v1115 = vadd.f32 %v1113, %v115
  %v1116 = vadd.f32 %v1114, %v115
  %v1117 = vsel %vm177, %v1115, -inf
  %1118 = vmax.xlane.f32.xlu0 %v1117
  %v1119 = vpop.xlane.xlu0 %1118
  %v1120 = vsel %vm177, %v1116, -inf
  %1121 = vmax.xlane.f32.xlu0 %v1120
  %v1122 = vpop.xlane.xlu0 %1121
  %v1123 = vsub.f32 %v1115, %v1119
  %v1124 = vsub.f32 %v1116, %v1122
  %v1125 = vmul.f32 %v1123, 1.442695
  %v1126 = vpow.pop %v1125
  %v1127 = vmul.f32 %v1124, 1.442695
  %v1128 = vpow.pop %v1127
  %v1129 = vsel %vm177, %v1126, 0.0
  %1130 = vadd.xlane.f32.xlu0 %v1129
  %v1131 = vpop.xlane.xlu0 %1130
  %v1132 = vsel %vm177, %v1128, 0.0
  %1133 = vadd.xlane.f32.xlu0 %v1132
  %v1134 = vpop.xlane.xlu0 %1133
  %v1135 = vrcp.pop %v1131
  %v1136 = vrcp.pop %v1134
  %v1137 = vmul.f32 %v1126, %v1135
  %v1138 = vmul.f32 %v1128, %v1136
  %1139 = vrot.lane.b32.xlu0 %v1054, 64
  %v1140 = vpop.permute.xlu0 %1139
  %v1143 = vsel %vm177, %v1137, 0
  %1145 = vmatpush.msra.mxu0 0.0
  %1146 = vmatpush.msra.mxu0 0.0
  %1147 = vmatpush.msra.mxu0 0.0
  %1148 = vmatpush.msra.mxu0 0.0
  %1149 = vmatpush.msra.mxu0 0.0
  %1150 = vmatpush.msra.mxu0 0.0
  %1151 = vmatpush.msra.mxu0 0.0
  %1152 = vmatpush.msra.mxu0 0.0
  %1153 = vmatpush.msra.mxu0 0.0
  %1154 = vmatpush.msra.mxu0 0.0
  %1155 = vmatpush.msra.mxu0 0.0
  %1156 = vmatpush.msra.mxu0 0.0
  %1157 = vmatpush.msra.mxu0 0.0
  %1158 = vmatpush.msra.mxu0 0.0
  %1159 = vmatpush.msra.mxu0 0.0
  %1160 = vmatpush.msra.mxu0 %v1140
  %1161 = vmatmul.f32.gmra.mxu0 %v1143
  %v1162 = vpop.f32.mrf.mxu0
  %v1163 = vadd.f32 0.0, %v1162
  %1164 = vdwg.mxu0
  %1165 = vrot.lane.b32.xlu0 %v1057, 64
  %v1166 = vpop.permute.xlu0 %1165
  %v1169 = vsel %vm177, %v1138, 0
  %1171 = vmatpush.msra.mxu0 0.0
  %1172 = vmatpush.msra.mxu0 0.0
  %1173 = vmatpush.msra.mxu0 0.0
  %1174 = vmatpush.msra.mxu0 0.0
  %1175 = vmatpush.msra.mxu0 0.0
  %1176 = vmatpush.msra.mxu0 0.0
  %1177 = vmatpush.msra.mxu0 0.0
  %1178 = vmatpush.msra.mxu0 0.0
  %1179 = vmatpush.msra.mxu0 0.0
  %1180 = vmatpush.msra.mxu0 0.0
  %1181 = vmatpush.msra.mxu0 0.0
  %1182 = vmatpush.msra.mxu0 0.0
  %1183 = vmatpush.msra.mxu0 0.0
  %1184 = vmatpush.msra.mxu0 0.0
  %1185 = vmatpush.msra.mxu0 0.0
  %1186 = vmatpush.msra.mxu0 %v1166
  %1187 = vmatmul.f32.gmra.mxu0 %v1169
  %v1188 = vpop.f32.mrf.mxu0
  %v1189 = vadd.f32 0.0, %v1188
  %1190 = vdwg.mxu0
  %v1192 = vsel %vm177, %v1163, 0
  %v1195 = vsel %vm177, %v1189, 0
  %1197 = vmatpush.msra.mxu0 0.0
  %1198 = vmatpush.msra.mxu0 0.0
  %1199 = vmatpush.msra.mxu0 0.0
  %1200 = vmatpush.msra.mxu0 0.0
  %1201 = vmatpush.msra.mxu0 0.0
  %1202 = vmatpush.msra.mxu0 0.0
  %1203 = vmatpush.msra.mxu0 0.0
  %1204 = vmatpush.msra.mxu0 0.0
  %1205 = vmatpush.msra.mxu0 0.0
  %1206 = vmatpush.msra.mxu0 0.0
  %1207 = vmatpush.msra.mxu0 0.0
  %1208 = vmatpush.msra.mxu0 0.0
  %1209 = vmatpush.msra.mxu0 0.0
  %1210 = vmatpush.msra.mxu0 0.0
  %1211 = vmatpush.msra.mxu0 0.0
  %1212 = vmatpush.msra.mxu0 %v1005
  %1213 = vmatmul.f32.gmra.mxu0 %v1192
  %v1214 = vpop.f32.mrf.mxu0
  %v1215 = vadd.f32 0.0, %v1214
  %1216 = vmatmul.f32.gmra.mxu0 %v1195
  %v1217 = vpop.f32.mrf.mxu0
  %v1218 = vadd.f32 0.0, %v1217
  %1219 = vdwg.mxu0
  %v1220 = vperm.slane %v1022, 0
  %v1221 = vadd.f32 %v1220, %v1215
  %v1222 = vadd.f32 %v1220, %v1218
  %1223 = vrot.lane.b32.xlu0 %v1054, 120
  %v1224 = vpop.permute.xlu0 %1223
  %1225 = vrot.lane.b32.xlu0 %v1054, 88
  %v1226 = vpop.permute.xlu0 %1225
  %v1227 = vsel %vm177, %v1224, 0
  %v1229 = vsel %vm177, %v1226, 0
  %1231 = vmatpush.xpose.msra.mxu0 0.0
  %1232 = vmatpush.xpose.msra.mxu0 0.0
  %1233 = vmatpush.xpose.msra.mxu0 0.0
  %1234 = vmatpush.xpose.msra.mxu0 0.0
  %1235 = vmatpush.xpose.msra.mxu0 0.0
  %1236 = vmatpush.xpose.msra.mxu0 0.0
  %1237 = vmatpush.xpose.msra.mxu0 0.0
  %1238 = vmatpush.xpose.msra.mxu0 0.0
  %1239 = vmatpush.xpose.msra.mxu0 0.0
  %1240 = vmatpush.xpose.msra.mxu0 0.0
  %1241 = vmatpush.xpose.msra.mxu0 0.0
  %1242 = vmatpush.xpose.msra.mxu0 0.0
  %1243 = vmatpush.xpose.msra.mxu0 0.0
  %1244 = vmatpush.xpose.msra.mxu0 0.0
  %1245 = vmatpush.xpose.msra.mxu0 0.0
  %1246 = vmatpush.xpose.msra.mxu0 %v1229
  %1247 = vmatmul.f32.gmra.mxu0 %v1227
  %v1248 = vpop.f32.mrf.mxu0
  %v1249 = vadd.f32 0.0, %v1248
  %1250 = vdwg.mxu0
  %1251 = vrot.lane.b32.xlu0 %v1057, 120
  %v1252 = vpop.permute.xlu0 %1251
  %1253 = vrot.lane.b32.xlu0 %v1057, 88
  %v1254 = vpop.permute.xlu0 %1253
  %v1255 = vsel %vm177, %v1252, 0
  %v1257 = vsel %vm177, %v1254, 0
  %1259 = vmatpush.xpose.msra.mxu0 0.0
  %1260 = vmatpush.xpose.msra.mxu0 0.0
  %1261 = vmatpush.xpose.msra.mxu0 0.0
  %1262 = vmatpush.xpose.msra.mxu0 0.0
  %1263 = vmatpush.xpose.msra.mxu0 0.0
  %1264 = vmatpush.xpose.msra.mxu0 0.0
  %1265 = vmatpush.xpose.msra.mxu0 0.0
  %1266 = vmatpush.xpose.msra.mxu0 0.0
  %1267 = vmatpush.xpose.msra.mxu0 0.0
  %1268 = vmatpush.xpose.msra.mxu0 0.0
  %1269 = vmatpush.xpose.msra.mxu0 0.0
  %1270 = vmatpush.xpose.msra.mxu0 0.0
  %1271 = vmatpush.xpose.msra.mxu0 0.0
  %1272 = vmatpush.xpose.msra.mxu0 0.0
  %1273 = vmatpush.xpose.msra.mxu0 0.0
  %1274 = vmatpush.xpose.msra.mxu0 %v1257
  %1275 = vmatmul.f32.gmra.mxu0 %v1255
  %v1276 = vpop.f32.mrf.mxu0
  %v1277 = vadd.f32 0.0, %v1276
  %1278 = vdwg.mxu0
  %v1279 = vmul.f32 %v1249, 0.35355338
  %v1280 = vmul.f32 %v1277, 0.35355338
  %v1281 = vadd.f32 %v1279, %v115
  %v1282 = vadd.f32 %v1280, %v115
  %v1283 = vsel %vm177, %v1281, -inf
  %1284 = vmax.xlane.f32.xlu0 %v1283
  %v1285 = vpop.xlane.xlu0 %1284
  %v1286 = vsel %vm177, %v1282, -inf
  %1287 = vmax.xlane.f32.xlu0 %v1286
  %v1288 = vpop.xlane.xlu0 %1287
  %v1289 = vsub.f32 %v1281, %v1285
  %v1290 = vsub.f32 %v1282, %v1288
  %v1291 = vmul.f32 %v1289, 1.442695
  %v1292 = vpow.pop %v1291
  %v1293 = vmul.f32 %v1290, 1.442695
  %v1294 = vpow.pop %v1293
  %v1295 = vsel %vm177, %v1292, 0.0
  %1296 = vadd.xlane.f32.xlu0 %v1295
  %v1297 = vpop.xlane.xlu0 %1296
  %v1298 = vsel %vm177, %v1294, 0.0
  %1299 = vadd.xlane.f32.xlu0 %v1298
  %v1300 = vpop.xlane.xlu0 %1299
  %v1301 = vrcp.pop %v1297
  %v1302 = vrcp.pop %v1300
  %v1303 = vmul.f32 %v1292, %v1301
  %v1304 = vmul.f32 %v1294, %v1302
  %1305 = vrot.lane.b32.xlu0 %v1054, 56
  %v1306 = vpop.permute.xlu0 %1305
  %v1309 = vsel %vm177, %v1303, 0
  %1311 = vmatpush.msra.mxu0 0.0
  %1312 = vmatpush.msra.mxu0 0.0
  %1313 = vmatpush.msra.mxu0 0.0
  %1314 = vmatpush.msra.mxu0 0.0
  %1315 = vmatpush.msra.mxu0 0.0
  %1316 = vmatpush.msra.mxu0 0.0
  %1317 = vmatpush.msra.mxu0 0.0
  %1318 = vmatpush.msra.mxu0 0.0
  %1319 = vmatpush.msra.mxu0 0.0
  %1320 = vmatpush.msra.mxu0 0.0
  %1321 = vmatpush.msra.mxu0 0.0
  %1322 = vmatpush.msra.mxu0 0.0
  %1323 = vmatpush.msra.mxu0 0.0
  %1324 = vmatpush.msra.mxu0 0.0
  %1325 = vmatpush.msra.mxu0 0.0
  %1326 = vmatpush.msra.mxu0 %v1306
  %1327 = vmatmul.f32.gmra.mxu0 %v1309
  %v1328 = vpop.f32.mrf.mxu0
  %v1329 = vadd.f32 0.0, %v1328
  %1330 = vdwg.mxu0
  %1331 = vrot.lane.b32.xlu0 %v1057, 56
  %v1332 = vpop.permute.xlu0 %1331
  %v1335 = vsel %vm177, %v1304, 0
  %1337 = vmatpush.msra.mxu0 0.0
  %1338 = vmatpush.msra.mxu0 0.0
  %1339 = vmatpush.msra.mxu0 0.0
  %1340 = vmatpush.msra.mxu0 0.0
  %1341 = vmatpush.msra.mxu0 0.0
  %1342 = vmatpush.msra.mxu0 0.0
  %1343 = vmatpush.msra.mxu0 0.0
  %1344 = vmatpush.msra.mxu0 0.0
  %1345 = vmatpush.msra.mxu0 0.0
  %1346 = vmatpush.msra.mxu0 0.0
  %1347 = vmatpush.msra.mxu0 0.0
  %1348 = vmatpush.msra.mxu0 0.0
  %1349 = vmatpush.msra.mxu0 0.0
  %1350 = vmatpush.msra.mxu0 0.0
  %1351 = vmatpush.msra.mxu0 0.0
  %1352 = vmatpush.msra.mxu0 %v1332
  %1353 = vmatmul.f32.gmra.mxu0 %v1335
  %v1354 = vpop.f32.mrf.mxu0
  %v1355 = vadd.f32 0.0, %v1354
  %1356 = vdwg.mxu0
  %v1358 = vsel %vm177, %v1329, 0
  %v1361 = vsel %vm177, %v1355, 0
  %1363 = vmatpush.msra.mxu0 0.0
  %1364 = vmatpush.msra.mxu0 0.0
  %1365 = vmatpush.msra.mxu0 0.0
  %1366 = vmatpush.msra.mxu0 0.0
  %1367 = vmatpush.msra.mxu0 0.0
  %1368 = vmatpush.msra.mxu0 0.0
  %1369 = vmatpush.msra.mxu0 0.0
  %1370 = vmatpush.msra.mxu0 0.0
  %1371 = vmatpush.msra.mxu0 0.0
  %1372 = vmatpush.msra.mxu0 0.0
  %1373 = vmatpush.msra.mxu0 0.0
  %1374 = vmatpush.msra.mxu0 0.0
  %1375 = vmatpush.msra.mxu0 0.0
  %1376 = vmatpush.msra.mxu0 0.0
  %1377 = vmatpush.msra.mxu0 0.0
  %1378 = vmatpush.msra.mxu0 %v1006
  %1379 = vmatmul.f32.gmra.mxu0 %v1358
  %v1380 = vpop.f32.mrf.mxu0
  %v1381 = vadd.f32 0.0, %v1380
  %1382 = vmatmul.f32.gmra.mxu0 %v1361
  %v1383 = vpop.f32.mrf.mxu0
  %v1384 = vadd.f32 0.0, %v1383
  %1385 = vdwg.mxu0
  %v1386 = vadd.f32 %v1221, %v1381
  %v1387 = vadd.f32 %v1222, %v1384
  %1388 = vrot.lane.b32.xlu0 %v1054, 112
  %v1389 = vpop.permute.xlu0 %1388
  %1390 = vrot.lane.b32.xlu0 %v1054, 80
  %v1391 = vpop.permute.xlu0 %1390
  %v1392 = vsel %vm177, %v1389, 0
  %v1394 = vsel %vm177, %v1391, 0
  %1396 = vmatpush.xpose.msra.mxu0 0.0
  %1397 = vmatpush.xpose.msra.mxu0 0.0
  %1398 = vmatpush.xpose.msra.mxu0 0.0
  %1399 = vmatpush.xpose.msra.mxu0 0.0
  %1400 = vmatpush.xpose.msra.mxu0 0.0
  %1401 = vmatpush.xpose.msra.mxu0 0.0
  %1402 = vmatpush.xpose.msra.mxu0 0.0
  %1403 = vmatpush.xpose.msra.mxu0 0.0
  %1404 = vmatpush.xpose.msra.mxu0 0.0
  %1405 = vmatpush.xpose.msra.mxu0 0.0
  %1406 = vmatpush.xpose.msra.mxu0 0.0
  %1407 = vmatpush.xpose.msra.mxu0 0.0
  %1408 = vmatpush.xpose.msra.mxu0 0.0
  %1409 = vmatpush.xpose.msra.mxu0 0.0
  %1410 = vmatpush.xpose.msra.mxu0 0.0
  %1411 = vmatpush.xpose.msra.mxu0 %v1394
  %1412 = vmatmul.f32.gmra.mxu0 %v1392
  %v1413 = vpop.f32.mrf.mxu0
  %v1414 = vadd.f32 0.0, %v1413
  %1415 = vdwg.mxu0
  %1416 = vrot.lane.b32.xlu0 %v1057, 112
  %v1417 = vpop.permute.xlu0 %1416
  %1418 = vrot.lane.b32.xlu0 %v1057, 80
  %v1419 = vpop.permute.xlu0 %1418
  %v1420 = vsel %vm177, %v1417, 0
  %v1422 = vsel %vm177, %v1419, 0
  %1424 = vmatpush.xpose.msra.mxu0 0.0
  %1425 = vmatpush.xpose.msra.mxu0 0.0
  %1426 = vmatpush.xpose.msra.mxu0 0.0
  %1427 = vmatpush.xpose.msra.mxu0 0.0
  %1428 = vmatpush.xpose.msra.mxu0 0.0
  %1429 = vmatpush.xpose.msra.mxu0 0.0
  %1430 = vmatpush.xpose.msra.mxu0 0.0
  %1431 = vmatpush.xpose.msra.mxu0 0.0
  %1432 = vmatpush.xpose.msra.mxu0 0.0
  %1433 = vmatpush.xpose.msra.mxu0 0.0
  %1434 = vmatpush.xpose.msra.mxu0 0.0
  %1435 = vmatpush.xpose.msra.mxu0 0.0
  %1436 = vmatpush.xpose.msra.mxu0 0.0
  %1437 = vmatpush.xpose.msra.mxu0 0.0
  %1438 = vmatpush.xpose.msra.mxu0 0.0
  %1439 = vmatpush.xpose.msra.mxu0 %v1422
  %1440 = vmatmul.f32.gmra.mxu0 %v1420
  %v1441 = vpop.f32.mrf.mxu0
  %v1442 = vadd.f32 0.0, %v1441
  %1443 = vdwg.mxu0
  %v1444 = vmul.f32 %v1414, 0.35355338
  %v1445 = vmul.f32 %v1442, 0.35355338
  %v1446 = vadd.f32 %v1444, %v115
  %v1447 = vadd.f32 %v1445, %v115
  %v1448 = vsel %vm177, %v1446, -inf
  %1449 = vmax.xlane.f32.xlu0 %v1448
  %v1450 = vpop.xlane.xlu0 %1449
  %v1451 = vsel %vm177, %v1447, -inf
  %1452 = vmax.xlane.f32.xlu0 %v1451
  %v1453 = vpop.xlane.xlu0 %1452
  %v1454 = vsub.f32 %v1446, %v1450
  %v1455 = vsub.f32 %v1447, %v1453
  %v1456 = vmul.f32 %v1454, 1.442695
  %v1457 = vpow.pop %v1456
  %v1458 = vmul.f32 %v1455, 1.442695
  %v1459 = vpow.pop %v1458
  %v1460 = vsel %vm177, %v1457, 0.0
  %1461 = vadd.xlane.f32.xlu0 %v1460
  %v1462 = vpop.xlane.xlu0 %1461
  %v1463 = vsel %vm177, %v1459, 0.0
  %1464 = vadd.xlane.f32.xlu0 %v1463
  %v1465 = vpop.xlane.xlu0 %1464
  %v1466 = vrcp.pop %v1462
  %v1467 = vrcp.pop %v1465
  %v1468 = vmul.f32 %v1457, %v1466
  %v1469 = vmul.f32 %v1459, %v1467
  %1470 = vrot.lane.b32.xlu0 %v1054, 48
  %v1471 = vpop.permute.xlu0 %1470
  %v1474 = vsel %vm177, %v1468, 0
  %1476 = vmatpush.msra.mxu0 0.0
  %1477 = vmatpush.msra.mxu0 0.0
  %1478 = vmatpush.msra.mxu0 0.0
  %1479 = vmatpush.msra.mxu0 0.0
  %1480 = vmatpush.msra.mxu0 0.0
  %1481 = vmatpush.msra.mxu0 0.0
  %1482 = vmatpush.msra.mxu0 0.0
  %1483 = vmatpush.msra.mxu0 0.0
  %1484 = vmatpush.msra.mxu0 0.0
  %1485 = vmatpush.msra.mxu0 0.0
  %1486 = vmatpush.msra.mxu0 0.0
  %1487 = vmatpush.msra.mxu0 0.0
  %1488 = vmatpush.msra.mxu0 0.0
  %1489 = vmatpush.msra.mxu0 0.0
  %1490 = vmatpush.msra.mxu0 0.0
  %1491 = vmatpush.msra.mxu0 %v1471
  %1492 = vmatmul.f32.gmra.mxu0 %v1474
  %v1493 = vpop.f32.mrf.mxu0
  %v1494 = vadd.f32 0.0, %v1493
  %1495 = vdwg.mxu0
  %1496 = vrot.lane.b32.xlu0 %v1057, 48
  %v1497 = vpop.permute.xlu0 %1496
  %v1500 = vsel %vm177, %v1469, 0
  %1502 = vmatpush.msra.mxu0 0.0
  %1503 = vmatpush.msra.mxu0 0.0
  %1504 = vmatpush.msra.mxu0 0.0
  %1505 = vmatpush.msra.mxu0 0.0
  %1506 = vmatpush.msra.mxu0 0.0
  %1507 = vmatpush.msra.mxu0 0.0
  %1508 = vmatpush.msra.mxu0 0.0
  %1509 = vmatpush.msra.mxu0 0.0
  %1510 = vmatpush.msra.mxu0 0.0
  %1511 = vmatpush.msra.mxu0 0.0
  %1512 = vmatpush.msra.mxu0 0.0
  %1513 = vmatpush.msra.mxu0 0.0
  %1514 = vmatpush.msra.mxu0 0.0
  %1515 = vmatpush.msra.mxu0 0.0
  %1516 = vmatpush.msra.mxu0 0.0
  %1517 = vmatpush.msra.mxu0 %v1497
  %1518 = vmatmul.f32.gmra.mxu0 %v1500
  %v1519 = vpop.f32.mrf.mxu0
  %v1520 = vadd.f32 0.0, %v1519
  %1521 = vdwg.mxu0
  %v1523 = vsel %vm177, %v1494, 0
  %v1526 = vsel %vm177, %v1520, 0
  %1528 = vmatpush.msra.mxu0 0.0
  %1529 = vmatpush.msra.mxu0 0.0
  %1530 = vmatpush.msra.mxu0 0.0
  %1531 = vmatpush.msra.mxu0 0.0
  %1532 = vmatpush.msra.mxu0 0.0
  %1533 = vmatpush.msra.mxu0 0.0
  %1534 = vmatpush.msra.mxu0 0.0
  %1535 = vmatpush.msra.mxu0 0.0
  %1536 = vmatpush.msra.mxu0 0.0
  %1537 = vmatpush.msra.mxu0 0.0
  %1538 = vmatpush.msra.mxu0 0.0
  %1539 = vmatpush.msra.mxu0 0.0
  %1540 = vmatpush.msra.mxu0 0.0
  %1541 = vmatpush.msra.mxu0 0.0
  %1542 = vmatpush.msra.mxu0 0.0
  %1543 = vmatpush.msra.mxu0 %v1007
  %1544 = vmatmul.f32.gmra.mxu0 %v1523
  %v1545 = vpop.f32.mrf.mxu0
  %v1546 = vadd.f32 0.0, %v1545
  %1547 = vmatmul.f32.gmra.mxu0 %v1526
  %v1548 = vpop.f32.mrf.mxu0
  %v1549 = vadd.f32 0.0, %v1548
  %1550 = vdwg.mxu0
  %v1551 = vadd.f32 %v1386, %v1546
  %v1552 = vadd.f32 %v1387, %v1549
  %1553 = vrot.lane.b32.xlu0 %v1054, 104
  %v1554 = vpop.permute.xlu0 %1553
  %1555 = vrot.lane.b32.xlu0 %v1054, 72
  %v1556 = vpop.permute.xlu0 %1555
  %v1557 = vsel %vm177, %v1554, 0
  %v1559 = vsel %vm177, %v1556, 0
  %1561 = vmatpush.xpose.msra.mxu0 0.0
  %1562 = vmatpush.xpose.msra.mxu0 0.0
  %1563 = vmatpush.xpose.msra.mxu0 0.0
  %1564 = vmatpush.xpose.msra.mxu0 0.0
  %1565 = vmatpush.xpose.msra.mxu0 0.0
  %1566 = vmatpush.xpose.msra.mxu0 0.0
  %1567 = vmatpush.xpose.msra.mxu0 0.0
  %1568 = vmatpush.xpose.msra.mxu0 0.0
  %1569 = vmatpush.xpose.msra.mxu0 0.0
  %1570 = vmatpush.xpose.msra.mxu0 0.0
  %1571 = vmatpush.xpose.msra.mxu0 0.0
  %1572 = vmatpush.xpose.msra.mxu0 0.0
  %1573 = vmatpush.xpose.msra.mxu0 0.0
  %1574 = vmatpush.xpose.msra.mxu0 0.0
  %1575 = vmatpush.xpose.msra.mxu0 0.0
  %1576 = vmatpush.xpose.msra.mxu0 %v1559
  %1577 = vmatmul.f32.gmra.mxu0 %v1557
  %v1578 = vpop.f32.mrf.mxu0
  %v1579 = vadd.f32 0.0, %v1578
  %1580 = vdwg.mxu0
  %1581 = vrot.lane.b32.xlu0 %v1057, 104
  %v1582 = vpop.permute.xlu0 %1581
  %1583 = vrot.lane.b32.xlu0 %v1057, 72
  %v1584 = vpop.permute.xlu0 %1583
  %v1585 = vsel %vm177, %v1582, 0
  %v1587 = vsel %vm177, %v1584, 0
  %1589 = vmatpush.xpose.msra.mxu0 0.0
  %1590 = vmatpush.xpose.msra.mxu0 0.0
  %1591 = vmatpush.xpose.msra.mxu0 0.0
  %1592 = vmatpush.xpose.msra.mxu0 0.0
  %1593 = vmatpush.xpose.msra.mxu0 0.0
  %1594 = vmatpush.xpose.msra.mxu0 0.0
  %1595 = vmatpush.xpose.msra.mxu0 0.0
  %1596 = vmatpush.xpose.msra.mxu0 0.0
  %1597 = vmatpush.xpose.msra.mxu0 0.0
  %1598 = vmatpush.xpose.msra.mxu0 0.0
  %1599 = vmatpush.xpose.msra.mxu0 0.0
  %1600 = vmatpush.xpose.msra.mxu0 0.0
  %1601 = vmatpush.xpose.msra.mxu0 0.0
  %1602 = vmatpush.xpose.msra.mxu0 0.0
  %1603 = vmatpush.xpose.msra.mxu0 0.0
  %1604 = vmatpush.xpose.msra.mxu0 %v1587
  %1605 = vmatmul.f32.gmra.mxu0 %v1585
  %v1606 = vpop.f32.mrf.mxu0
  %v1607 = vadd.f32 0.0, %v1606
  %1608 = vdwg.mxu0
  %v1609 = vmul.f32 %v1579, 0.35355338
  %v1610 = vmul.f32 %v1607, 0.35355338
  %v1611 = vadd.f32 %v1609, %v115
  %v1612 = vadd.f32 %v1610, %v115
  %v1613 = vsel %vm177, %v1611, -inf
  %1614 = vmax.xlane.f32.xlu0 %v1613
  %v1615 = vpop.xlane.xlu0 %1614
  %v1616 = vsel %vm177, %v1612, -inf
  %1617 = vmax.xlane.f32.xlu0 %v1616
  %v1618 = vpop.xlane.xlu0 %1617
  %v1619 = vsub.f32 %v1611, %v1615
  %v1620 = vsub.f32 %v1612, %v1618
  %v1621 = vmul.f32 %v1619, 1.442695
  %v1622 = vpow.pop %v1621
  %v1623 = vmul.f32 %v1620, 1.442695
  %v1624 = vpow.pop %v1623
  %v1625 = vsel %vm177, %v1622, 0.0
  %1626 = vadd.xlane.f32.xlu0 %v1625
  %v1627 = vpop.xlane.xlu0 %1626
  %v1628 = vsel %vm177, %v1624, 0.0
  %1629 = vadd.xlane.f32.xlu0 %v1628
  %v1630 = vpop.xlane.xlu0 %1629
  %v1631 = vrcp.pop %v1627
  %v1632 = vrcp.pop %v1630
  %v1633 = vmul.f32 %v1622, %v1631
  %v1634 = vmul.f32 %v1624, %v1632
  %1635 = vrot.lane.b32.xlu0 %v1054, 40
  %v1636 = vpop.permute.xlu0 %1635
  %v1639 = vsel %vm177, %v1633, 0
  %1641 = vmatpush.msra.mxu0 0.0
  %1642 = vmatpush.msra.mxu0 0.0
  %1643 = vmatpush.msra.mxu0 0.0
  %1644 = vmatpush.msra.mxu0 0.0
  %1645 = vmatpush.msra.mxu0 0.0
  %1646 = vmatpush.msra.mxu0 0.0
  %1647 = vmatpush.msra.mxu0 0.0
  %1648 = vmatpush.msra.mxu0 0.0
  %1649 = vmatpush.msra.mxu0 0.0
  %1650 = vmatpush.msra.mxu0 0.0
  %1651 = vmatpush.msra.mxu0 0.0
  %1652 = vmatpush.msra.mxu0 0.0
  %1653 = vmatpush.msra.mxu0 0.0
  %1654 = vmatpush.msra.mxu0 0.0
  %1655 = vmatpush.msra.mxu0 0.0
  %1656 = vmatpush.msra.mxu0 %v1636
  %1657 = vmatmul.f32.gmra.mxu0 %v1639
  %v1658 = vpop.f32.mrf.mxu0
  %v1659 = vadd.f32 0.0, %v1658
  %1660 = vdwg.mxu0
  %1661 = vrot.lane.b32.xlu0 %v1057, 40
  %v1662 = vpop.permute.xlu0 %1661
  %v1665 = vsel %vm177, %v1634, 0
  %1667 = vmatpush.msra.mxu0 0.0
  %1668 = vmatpush.msra.mxu0 0.0
  %1669 = vmatpush.msra.mxu0 0.0
  %1670 = vmatpush.msra.mxu0 0.0
  %1671 = vmatpush.msra.mxu0 0.0
  %1672 = vmatpush.msra.mxu0 0.0
  %1673 = vmatpush.msra.mxu0 0.0
  %1674 = vmatpush.msra.mxu0 0.0
  %1675 = vmatpush.msra.mxu0 0.0
  %1676 = vmatpush.msra.mxu0 0.0
  %1677 = vmatpush.msra.mxu0 0.0
  %1678 = vmatpush.msra.mxu0 0.0
  %1679 = vmatpush.msra.mxu0 0.0
  %1680 = vmatpush.msra.mxu0 0.0
  %1681 = vmatpush.msra.mxu0 0.0
  %1682 = vmatpush.msra.mxu0 %v1662
  %1683 = vmatmul.f32.gmra.mxu0 %v1665
  %v1684 = vpop.f32.mrf.mxu0
  %v1685 = vadd.f32 0.0, %v1684
  %1686 = vdwg.mxu0
  %v1688 = vsel %vm177, %v1659, 0
  %v1691 = vsel %vm177, %v1685, 0
  %1693 = vmatpush.msra.mxu0 0.0
  %1694 = vmatpush.msra.mxu0 0.0
  %1695 = vmatpush.msra.mxu0 0.0
  %1696 = vmatpush.msra.mxu0 0.0
  %1697 = vmatpush.msra.mxu0 0.0
  %1698 = vmatpush.msra.mxu0 0.0
  %1699 = vmatpush.msra.mxu0 0.0
  %1700 = vmatpush.msra.mxu0 0.0
  %1701 = vmatpush.msra.mxu0 0.0
  %1702 = vmatpush.msra.mxu0 0.0
  %1703 = vmatpush.msra.mxu0 0.0
  %1704 = vmatpush.msra.mxu0 0.0
  %1705 = vmatpush.msra.mxu0 0.0
  %1706 = vmatpush.msra.mxu0 0.0
  %1707 = vmatpush.msra.mxu0 0.0
  %1708 = vmatpush.msra.mxu0 %v1008
  %1709 = vmatmul.f32.gmra.mxu0 %v1688
  %v1710 = vpop.f32.mrf.mxu0
  %v1711 = vadd.f32 0.0, %v1710
  %1712 = vmatmul.f32.gmra.mxu0 %v1691
  %v1713 = vpop.f32.mrf.mxu0
  %v1714 = vadd.f32 0.0, %v1713
  %1715 = vdwg.mxu0
  %v1716 = vadd.f32 %v1551, %v1711
  %v1717 = vadd.f32 %v1552, %v1714
  %v1718 = vadd.f32 %v999, %v1716
  %v1719 = vadd.f32 %v1000, %v1717
  %v1720 = vsel %vm52, %v1718, 0.0
  %1721 = vadd.xlane.f32.xlu0 %v1720
  %v1722 = vpop.xlane.xlu0 %1721
  %v1723 = vsel %vm52, %v1719, 0.0
  %1724 = vadd.xlane.f32.xlu0 %v1723
  %v1725 = vpop.xlane.xlu0 %1724
  %v1726 = vmul.f32 %v1722, %v65
  %v1727 = vmul.f32 %v1725, %v65
  %v1728 = vsub.f32 %v1718, %v1726
  %v1729 = vsub.f32 %v1719, %v1727
  %v1730 = vmul.f32 %v1728, %v1728
  %v1731 = vmul.f32 %v1729, %v1729
  %v1732 = vsel %vm52, %v1730, 0.0
  %1733 = vadd.xlane.f32.xlu0 %v1732
  %v1734 = vpop.xlane.xlu0 %1733
  %v1735 = vsel %vm52, %v1731, 0.0
  %1736 = vadd.xlane.f32.xlu0 %v1735
  %v1737 = vpop.xlane.xlu0 %1736
  %v1738 = vmul.f32 %v1734, %v65
  %v1739 = vmul.f32 %v1737, %v65
  %v1740 = vadd.f32 %v1738, 1e-05
  %v1741 = vadd.f32 %v1739, 1e-05
  %v1742 = vrsqrt.pop %v1740
  %v1743 = vmul.f32 %v1742, %v1740
  %v1744 = vmul.f32 %v1743, %v1742
  %v1745 = vmul.f32 0.5, %v1744
  %v1746 = vsub.f32 1.5, %v1745
  %v1747 = vmul.f32 %v1742, %v1746
  %vm1748 = vweird.f32 %v1740
  %vm1749 = vweird.f32 %v1742
  %vm1750 = vmor %vm1748, %vm1749
  %v1751 = vsel %vm1750, %v1742, %v1747
  %v1752 = vrsqrt.pop %v1741
  %v1753 = vmul.f32 %v1752, %v1741
  %v1754 = vmul.f32 %v1753, %v1752
  %v1755 = vmul.f32 0.5, %v1754
  %v1756 = vsub.f32 1.5, %v1755
  %v1757 = vmul.f32 %v1752, %v1756
  %vm1758 = vweird.f32 %v1741
  %vm1759 = vweird.f32 %v1752
  %vm1760 = vmor %vm1758, %vm1759
  %v1761 = vsel %vm1760, %v1752, %v1757
  %v1762 = vmul.f32 %v1728, %v1751
  %v1763 = vmul.f32 %v1729, %v1761
  %v1764 = vperm.slane %v1023, 0
  %v1765 = vmul.f32 %v1762, %v1764
  %v1766 = vmul.f32 %v1763, %v1764
  %v1767 = vperm.slane %v1024, 0
  %v1768 = vadd.f32 %v1765, %v1767
  %v1769 = vadd.f32 %v1766, %v1767
  %v1770 = vperm.slane %v1027, 0
  %v1772 = vsel %vm52, %v1768, 0
  %v1775 = vsel %vm52, %v1769, 0
  %1777 = vmatpush.msra.mxu0 0.0
  %1778 = vmatpush.msra.mxu0 0.0
  %1779 = vmatpush.msra.mxu0 0.0
  %1780 = vmatpush.msra.mxu0 0.0
  %1781 = vmatpush.msra.mxu0 0.0
  %1782 = vmatpush.msra.mxu0 0.0
  %1783 = vmatpush.msra.mxu0 0.0
  %1784 = vmatpush.msra.mxu0 0.0
  %1785 = vmatpush.msra.mxu0 0.0
  %1786 = vmatpush.msra.mxu0 0.0
  %1787 = vmatpush.msra.mxu0 0.0
  %1788 = vmatpush.msra.mxu0 0.0
  %1789 = vmatpush.msra.mxu0 %v1012
  %1790 = vmatpush.msra.mxu0 %v1011
  %1791 = vmatpush.msra.mxu0 %v1010
  %1792 = vmatpush.msra.mxu0 %v1009
  %1793 = vmatmul.f32.gmra.mxu0 %v1772
  %v1794 = vpop.f32.mrf.mxu0
  %v1795 = vadd.f32 %v1770, %v1794
  %1796 = vmatmul.f32.gmra.mxu0 %v1775
  %v1797 = vpop.f32.mrf.mxu0
  %v1798 = vadd.f32 %v1770, %v1797
  %1799 = vdwg.mxu0
  %v1800 = vmax.f32 %v1795, 0.0
  %v1801 = vmax.f32 %v1798, 0.0
  %v1802 = vperm.slane %v1028, 0
  %v1804 = vsel %vm919, %v1800, 0
  %v1807 = vsel %vm919, %v1801, 0
  %1809 = vmatpush.msra.mxu0 0.0
  %1810 = vmatpush.msra.mxu0 0.0
  %1811 = vmatpush.msra.mxu0 0.0
  %1812 = vmatpush.msra.mxu0 0.0
  %1813 = vmatpush.msra.mxu0 0.0
  %1814 = vmatpush.msra.mxu0 0.0
  %1815 = vmatpush.msra.mxu0 0.0
  %1816 = vmatpush.msra.mxu0 0.0
  %1817 = vmatpush.msra.mxu0 %v1020
  %1818 = vmatpush.msra.mxu0 %v1019
  %1819 = vmatpush.msra.mxu0 %v1018
  %1820 = vmatpush.msra.mxu0 %v1017
  %1821 = vmatpush.msra.mxu0 %v1016
  %1822 = vmatpush.msra.mxu0 %v1015
  %1823 = vmatpush.msra.mxu0 %v1014
  %1824 = vmatpush.msra.mxu0 %v1013
  %1825 = vmatmul.f32.gmra.mxu0 %v1804
  %v1826 = vpop.f32.mrf.mxu0
  %v1827 = vadd.f32 %v1802, %v1826
  %1828 = vmatmul.f32.gmra.mxu0 %v1807
  %v1829 = vpop.f32.mrf.mxu0
  %v1830 = vadd.f32 %v1802, %v1829
  %1831 = vdwg.mxu0
  %v1832 = vadd.f32 %v1768, %v1827
  %v1833 = vadd.f32 %v1769, %v1830
  %v1834 = vsel %vm52, %v1832, 0.0
  %1835 = vadd.xlane.f32.xlu0 %v1834
  %v1836 = vpop.xlane.xlu0 %1835
  %v1837 = vsel %vm52, %v1833, 0.0
  %1838 = vadd.xlane.f32.xlu0 %v1837
  %v1839 = vpop.xlane.xlu0 %1838
  %v1840 = vmul.f32 %v1836, %v65
  %v1841 = vmul.f32 %v1839, %v65
  %v1842 = vsub.f32 %v1832, %v1840
  %v1843 = vsub.f32 %v1833, %v1841
  %v1844 = vmul.f32 %v1842, %v1842
  %v1845 = vmul.f32 %v1843, %v1843
  %v1846 = vsel %vm52, %v1844, 0.0
  %1847 = vadd.xlane.f32.xlu0 %v1846
  %v1848 = vpop.xlane.xlu0 %1847
  %v1849 = vsel %vm52, %v1845, 0.0
  %1850 = vadd.xlane.f32.xlu0 %v1849
  %v1851 = vpop.xlane.xlu0 %1850
  %v1852 = vmul.f32 %v1848, %v65
  %v1853 = vmul.f32 %v1851, %v65
  %v1854 = vadd.f32 %v1852, 1e-05
  %v1855 = vadd.f32 %v1853, 1e-05
  %v1856 = vrsqrt.pop %v1854
  %v1857 = vmul.f32 %v1856, %v1854
  %v1858 = vmul.f32 %v1857, %v1856
  %v1859 = vmul.f32 0.5, %v1858
  %v1860 = vsub.f32 1.5, %v1859
  %v1861 = vmul.f32 %v1856, %v1860
  %vm1862 = vweird.f32 %v1854
  %vm1863 = vweird.f32 %v1856
  %vm1864 = vmor %vm1862, %vm1863
  %v1865 = vsel %vm1864, %v1856, %v1861
  %v1866 = vrsqrt.pop %v1855
  %v1867 = vmul.f32 %v1866, %v1855
  %v1868 = vmul.f32 %v1867, %v1866
  %v1869 = vmul.f32 0.5, %v1868
  %v1870 = vsub.f32 1.5, %v1869
  %v1871 = vmul.f32 %v1866, %v1870
  %vm1872 = vweird.f32 %v1855
  %vm1873 = vweird.f32 %v1866
  %vm1874 = vmor %vm1872, %vm1873
  %v1875 = vsel %vm1874, %v1866, %v1871
  %v1876 = vmul.f32 %v1842, %v1865
  %v1877 = vmul.f32 %v1843, %v1875
  %v1878 = vperm.slane %v1025, 0
  %v1879 = vmul.f32 %v1876, %v1878
  %v1880 = vmul.f32 %v1877, %v1878
  %v1881 = vperm.slane %v1026, 0
  %v1882 = vadd.f32 %v1879, %v1881
  %v1883 = vadd.f32 %v1880, %v1881
  %v1884 = vld [vmem:[%s1 + $0x150] sm:$0xff]
  %v1885 = vld [vmem:[%s1 + $0x158] sm:$0xff]
  %v1886 = vld [vmem:[%s1 + $0x160] sm:$0xff]
  %v1887 = vld [vmem:[%s1 + $0x168] sm:$0xff]
  %v1888 = vld [vmem:[%s2 + $0x13] sm:$0x1]
  %v1889 = vperm.slane %v1888, 0
  %v1891 = vsel %vm52, %v1882, 0
  %v1894 = vsel %vm52, %v1883, 0
  %1896 = vmatpush.msra.mxu0 0.0
  %1897 = vmatpush.msra.mxu0 0.0
  %1898 = vmatpush.msra.mxu0 0.0
  %1899 = vmatpush.msra.mxu0 0.0
  %1900 = vmatpush.msra.mxu0 0.0
  %1901 = vmatpush.msra.mxu0 0.0
  %1902 = vmatpush.msra.mxu0 0.0
  %1903 = vmatpush.msra.mxu0 0.0
  %1904 = vmatpush.msra.mxu0 0.0
  %1905 = vmatpush.msra.mxu0 0.0
  %1906 = vmatpush.msra.mxu0 0.0
  %1907 = vmatpush.msra.mxu0 0.0
  %1908 = vmatpush.msra.mxu0 %v1887
  %1909 = vmatpush.msra.mxu0 %v1886
  %1910 = vmatpush.msra.mxu0 %v1885
  %1911 = vmatpush.msra.mxu0 %v1884
  %1912 = vmatmul.f32.gmra.mxu0 %v1891
  %v1913 = vpop.f32.mrf.mxu0
  %v1914 = vadd.f32 %v1889, %v1913
  %1915 = vmatmul.f32.gmra.mxu0 %v1894
  %v1916 = vpop.f32.mrf.mxu0
  %v1917 = vadd.f32 %v1889, %v1916
  %1918 = vdwg.mxu0
  %v1919 = vxor.u32 %v1914, 2147483648
  %v1920 = vxor.u32 %v1917, 2147483648
  %v1921 = vmul.f32 %v1919, 1.442695
  %v1922 = vpow.pop %v1921
  %v1923 = vmul.f32 %v1920, 1.442695
  %v1924 = vpow.pop %v1923
  %v1925 = vadd.f32 %v1922, 1.0
  %v1926 = vadd.f32 %v1924, 1.0
  %v1927 = vrcp.pop %v1925
  %v1928 = vmul.f32 %v1925, %v1927
  %v1929 = vsub.f32 1.0, %v1928
  %v1930 = vmul.f32 %v1927, %v1929
  %v1931 = vadd.f32 %v1927, %v1930
  %vm1932 = vweird.f32 %v1925
  %vm1933 = vweird.f32 %v1927
  %vm1934 = vmor %vm1932, %vm1933
  %v1935 = vsel %vm1934, %v1927, %v1931
  %v1936 = vand.u32 2147483647, %v1925
  %vm1937 = vcmp.eq.f32.partialorder %v1936, 8.507059e+37
  %v1938 = vand.u32 %v1925, 2147483648
  %v1939 = vor.u32 1.1754944e-38, %v1938
  %v1940 = vsel %vm1937, %v1939, %v1935
  %v1941 = vmul.f32 1.0, %v1940
  %v1942 = vrcp.pop %v1926
  %v1943 = vmul.f32 %v1926, %v1942
  %v1944 = vsub.f32 1.0, %v1943
  %v1945 = vmul.f32 %v1942, %v1944
  %v1946 = vadd.f32 %v1942, %v1945
  %vm1947 = vweird.f32 %v1926
  %vm1948 = vweird.f32 %v1942
  %vm1949 = vmor %vm1947, %vm1948
  %v1950 = vsel %vm1949, %v1942, %v1946
  %v1951 = vand.u32 2147483647, %v1926
  %vm1952 = vcmp.eq.f32.partialorder %v1951, 8.507059e+37
  %v1953 = vand.u32 %v1926, 2147483648
  %v1954 = vor.u32 1.1754944e-38, %v1953
  %v1955 = vsel %vm1952, %v1954, %v1950
  %v1956 = vmul.f32 1.0, %v1955
  %1957 = vst.msk [vmem:[%s3] sm:$0xff] %vm177, %v1941
  %1958 = vst.msk [vmem:[%s3 + $0x8] sm:$0xff] %vm177, %v1956
  // Predicated region
  $region14: #{tpu_custom_call.1} parent=0 // pred_check
    _
  $region15: #{tpu_custom_call.1} parent=0 // pred_check_branch
    %1960 = sbr.rel (0) target = $region17
  $region16: #{tpu_custom_call.1} parent=0 // pred_region
    _
  $region17: #{tpu_custom_call.1} parent=0 // pred_fallthru
    _
  // Predicated region
  $region18: #{tpu_custom_call.1} parent=0 // pred_check
    _
  $region19: #{tpu_custom_call.1} parent=0 // pred_check_branch
    %1962 = sbr.rel (0) target = $region21
  $region20: #{tpu_custom_call.1} parent=0 // pred_region
    _
  $region21: #{tpu_custom_call.1} parent=0 // pred_fallthru
    _

</llo_original>
